<compile_context>
chip_gen: v6e
topology: v6e:2x2x1
jax: 0.10.0
libtpu: 0.0.40
codegen_flags: <defaults>
</compile_context>

<pallas_src>
import functools

import jax
import jax.numpy as jnp
from jax.experimental import pallas as pl
from jax.experimental.pallas import tpu as pltpu


# ----------------------------------------------------------------------------
# Kernel factory: feature-major MLP (ReLU after every layer) + floor()
# ----------------------------------------------------------------------------
def _make_mlp_kernel(n_layers, allow_rounding_correction):
    def kernel(*refs):
        obs_ref = refs[0]          # (in_feat, TILE_B)  -- batch on lanes
        out_ref = refs[-1]         # (2, TILE_B)
        param_refs = refs[1:-1]    # w0, b0, w1, b1, ...

        h = obs_ref[...]
        for j in range(n_layers):
            w = param_refs[2 * j][...]        # (out_j, in_j)
            b = param_refs[2 * j + 1][...]    # (out_j, 1), broadcast over lanes
            # Full-f32 MXU matmul: floor() below is discontinuous at integers,
            # so we deliberately avoid bf16 passes here.
            h = jnp.dot(w, h,
                        preferred_element_type=jnp.float32,
                        precision=jax.lax.Precision.HIGHEST) + b
            # Reference module applies relu after every layer, incl. the last.
            h = jnp.maximum(h, 0.0)
        if allow_rounding_correction:
            # h - frac(h) == floor(h) for h >= 0 (post-relu)
            h = jnp.floor(h)
        out_ref[...] = h
    return kernel


# ----------------------------------------------------------------------------
# One-time parameter prep (outside the hot path)
# ----------------------------------------------------------------------------
def prepare_params(params):
    """params: list of (w, b) pairs in PyTorch orientation, w: (out, in),
    b: (out,).  Returns a flat tuple (w0, b0, w1, b1, ...) with biases as
    (out, 1) columns for the feature-major kernel."""
    flat = []
    for w, b in params:
        flat.append(jnp.asarray(w, jnp.float32))
        flat.append(jnp.asarray(b, jnp.float32).reshape(-1, 1))
    return tuple(flat)


# ----------------------------------------------------------------------------
# Batch-tile selection: >=2 steps for megacore, balanced tiles, <=max_tile_b
# ----------------------------------------------------------------------------
def _round_up(x, m):
    return ((x + m - 1) // m) * m


def _choose_tile_b(B, max_tile_b=8192, num_cores=2):
    # Small batches: a single full-batch tile.  Block dims equal to the full
    # array dims are legal even when not multiples of (8, 128).
    if B <= 256:
        return B
    # Otherwise pick a 128-multiple tile so there are >= num_cores grid steps
    # (v7x has 2 TensorCores) and at most max_tile_b rows per step; rounding
    # cdiv(B, n_tiles) up also avoids pathological 1-row straggler tiles.
    n_tiles = max(num_cores, pl.cdiv(B, max_tile_b))
    tb = _round_up(pl.cdiv(B, n_tiles), 128)
    return min(tb, max_tile_b)


# ----------------------------------------------------------------------------
# Wrapper: obs assembly (cheap XLA, off hot path) + batch-gridded pallas_call
# ----------------------------------------------------------------------------
def controller_forward(current_demand, current_inventory,
                       past_regular_orders, past_expedited_orders,
                       prepared_params, lr, le, mean=0.0, std=0.0,
                       allow_rounding_correction=True, max_tile_b=8192):
    del current_demand  # unused by the reference forward as well
    # TODO(synk): list-of-tensors form of past_*_orders is not supported; pass 2-D arrays.
    B = current_inventory.shape[0]
    inv = current_inventory.reshape(B).astype(jnp.float32)

    # Assemble the observation exactly as the reference does (same column order
    # and same K-accumulation order -> identical f32 sums before floor()).
    reg_obs = past_regular_orders[:, -lr:].astype(jnp.float32)
    reg_obs = reg_obs.at[:, 0].add(inv)
    cols = [jnp.full((B, 1), mean, jnp.float32),
            jnp.full((B, 1), std, jnp.float32),
            reg_obs]
    if le > 0:
        cols.append(past_expedited_orders[:, -le:].astype(jnp.float32))
    obs_t = jnp.concatenate(cols, axis=-1).T        # (in_feat, B), batch on lanes
    in_feat = obs_t.shape[0]

    n_layers = len(prepared_params) // 2
    assert prepared_params[-2].shape[0] == 2, "output layer must have 2 units"
    kernel = _make_mlp_kernel(n_layers, allow_rounding_correction)

    tb = _choose_tile_b(B, max_tile_b=max_tile_b)
    grid = (pl.cdiv(B, tb),)

    def const_spec(shape):
        # Constant index map -> weights/biases stay VMEM-resident across tiles.
        return pl.BlockSpec(shape, lambda i: (0, 0))

    in_specs = [pl.BlockSpec((in_feat, tb), lambda i: (0, i))]
    in_specs += [const_spec(p.shape) for p in prepared_params]

    out = pl.pallas_call(
        kernel,
        out_shape=jax.ShapeDtypeStruct((2, B), jnp.float32),
        grid=grid,
        in_specs=in_specs,
        out_specs=pl.BlockSpec((2, tb), lambda i: (0, i)),
        compiler_params=pltpu.CompilerParams(
            dimension_semantics=("parallel",)),
    )(obs_t, *prepared_params)

    qr = out[0].reshape(B, 1)
    qe = out[1].reshape(B, 1)
    return qr, qe


# ----------------------------------------------------------------------------
# Pure-JAX reference (mirrors the original PyTorch math)
# ----------------------------------------------------------------------------
def controller_forward_ref(current_inventory, past_regular_orders,
                           past_expedited_orders, params, lr, le,
                           mean=0.0, std=0.0):
    B = current_inventory.shape[0]
    inv = current_inventory.reshape(B).astype(jnp.float32)
    reg_obs = past_regular_orders[:, -lr:].astype(jnp.float32)
    reg_obs = reg_obs.at[:, 0].add(inv)
    cols = [jnp.full((B, 1), mean, jnp.float32),
            jnp.full((B, 1), std, jnp.float32),
            reg_obs]
    if le > 0:
        cols.append(past_expedited_orders[:, -le:].astype(jnp.float32))
    h = jnp.concatenate(cols, axis=-1)
    for w, b in params:
        h = jnp.maximum(
            jnp.dot(h, w.T, precision=jax.lax.Precision.HIGHEST)
            + b.reshape(1, -1), 0.0)
    h = jnp.floor(h)
    return h[:, 0:1], h[:, 1:2]


def init_linear(key, fan_in, fan_out):
    # Deterministic init mimicking PyTorch Linear default uniform(-1/sqrt(fan_in), ...).
    kw, kb = jax.random.split(key)
    bound = 1.0 / jnp.sqrt(jnp.asarray(fan_in, jnp.float32))
    w = jax.random.uniform(kw, (fan_out, fan_in), jnp.float32, -bound, bound)
    b = jax.random.uniform(kb, (fan_out,), jnp.float32, -bound, bound)
    return w, b


if __name__ == "__main__":
    # TODO(synk): custom `activations` / `initializations` hooks are not supported;
    # the default relu-everywhere path of the module is implemented.
    lr, le = 3, 2
    n_hidden_units = [32, 32]
    B = 8
    in_features = lr + le + 2  # = 7
    mean, std = 1.5, 0.5

    key = jax.random.PRNGKey(0)
    k_inv, k_reg, k_exp, k_dem, k0, k1, k2 = jax.random.split(key, 7)

    current_demand = jax.random.uniform(k_dem, (B, 1), jnp.float32, 0.0, 10.0)
    current_inventory = jax.random.uniform(k_inv, (B, 1), jnp.float32, 0.0, 10.0)
    past_regular_orders = jax.random.uniform(k_reg, (B, 2 * lr), jnp.float32, 0.0, 5.0)
    past_expedited_orders = jax.random.uniform(k_exp, (B, 2 * le), jnp.float32, 0.0, 5.0)

    w0, b0 = init_linear(k0, in_features, n_hidden_units[0])        # input layer
    w1, b1 = init_linear(k1, n_hidden_units[0], n_hidden_units[1])  # hidden layer
    w2, b2 = init_linear(k2, n_hidden_units[1], 2)                  # output layer
    params = [(w0, b0), (w1, b1), (w2, b2)]

    prepared = prepare_params(params)

    fwd = jax.jit(functools.partial(controller_forward, lr=lr, le=le,
                                    mean=mean, std=std))
    qr, qe = fwd(current_demand, current_inventory,
                 past_regular_orders, past_expedited_orders, prepared)
    jax.block_until_ready((qr, qe))

    qr_ref, qe_ref = controller_forward_ref(current_inventory, past_regular_orders,
                                            past_expedited_orders, params, lr, le,
                                            mean=mean, std=std)
    assert qr.shape == (B, 1) and qe.shape == (B, 1)
    assert jnp.allclose(qr, qr_ref) and jnp.allclose(qe, qe_ref)

    print("KERNEL_OK")
</pallas_src>

<mosaic_0001>
module attributes {stable_mosaic.version = 11 : i64} {
  func.func @kernel(%arg0: i32, %arg1: memref<7x8xf32, #tpu.memory_space<vmem>>, %arg2: memref<32x7xf32, #tpu.memory_space<vmem>>, %arg3: memref<32x1xf32, #tpu.memory_space<vmem>>, %arg4: memref<32x32xf32, #tpu.memory_space<vmem>>, %arg5: memref<32x1xf32, #tpu.memory_space<vmem>>, %arg6: memref<2x32xf32, #tpu.memory_space<vmem>>, %arg7: memref<2x1xf32, #tpu.memory_space<vmem>>, %arg8: memref<2x8xf32, #tpu.memory_space<vmem>>) attributes {dimension_semantics = [#tpu.dimension_semantics<parallel>], iteration_bounds = array<i64: 1>, scalar_prefetch = 0 : i64, scratch_operands = 0 : i64, tpu.core_type = #tpu.core_type<tc>, window_params = [{transform_indices = @transform_0, window_bounds = array<i64: 7, 8>}, {pipeline_mode = #tpu.pipeline_mode<synchronous>, transform_indices = @transform_1, window_bounds = array<i64: 32, 7>}, {pipeline_mode = #tpu.pipeline_mode<synchronous>, transform_indices = @transform_2, window_bounds = array<i64: 32, 1>}, {pipeline_mode = #tpu.pipeline_mode<synchronous>, transform_indices = @transform_3, window_bounds = array<i64: 32, 32>}, {pipeline_mode = #tpu.pipeline_mode<synchronous>, transform_indices = @transform_4, window_bounds = array<i64: 32, 1>}, {pipeline_mode = #tpu.pipeline_mode<synchronous>, transform_indices = @transform_5, window_bounds = array<i64: 2, 32>}, {pipeline_mode = #tpu.pipeline_mode<synchronous>, transform_indices = @transform_6, window_bounds = array<i64: 2, 1>}, {transform_indices = @transform_7, window_bounds = array<i64: 2, 8>}]} {
    %c0 = arith.constant 0 : index
    %c0_0 = arith.constant 0 : index
    %0 = vector.load %arg1[%c0, %c0_0] : memref<7x8xf32, #tpu.memory_space<vmem>>, vector<7x8xf32>
    %c0_1 = arith.constant 0 : index
    %c0_2 = arith.constant 0 : index
    %1 = vector.load %arg2[%c0_1, %c0_2] : memref<32x7xf32, #tpu.memory_space<vmem>>, vector<32x7xf32>
    %c0_3 = arith.constant 0 : index
    %c0_4 = arith.constant 0 : index
    %2 = vector.load %arg3[%c0_3, %c0_4] : memref<32x1xf32, #tpu.memory_space<vmem>>, vector<32x1xf32>
    %cst = arith.constant dense<0.000000e+00> : vector<32x8xf32>
    %3 = tpu.matmul %1, %0, %cst {dimension_numbers = #tpu.dot_dimension_numbers<[1], [0], [0], [1], [0, 0, 1, 1], [], []>, precision = #tpu.contract_precision<fp32>} : vector<32x7xf32>, vector<7x8xf32>, vector<32x8xf32> -> vector<32x8xf32>
    %4 = vector.broadcast %2 : vector<32x1xf32> to vector<32x8xf32>
    %5 = arith.addf %3, %4 : vector<32x8xf32>
    %cst_5 = arith.constant 0.000000e+00 : f32
    %6 = vector.broadcast %cst_5 : f32 to vector<32x8xf32>
    %7 = arith.maximumf %5, %6 : vector<32x8xf32>
    %c0_6 = arith.constant 0 : index
    %c0_7 = arith.constant 0 : index
    %8 = vector.load %arg4[%c0_6, %c0_7] : memref<32x32xf32, #tpu.memory_space<vmem>>, vector<32x32xf32>
    %c0_8 = arith.constant 0 : index
    %c0_9 = arith.constant 0 : index
    %9 = vector.load %arg5[%c0_8, %c0_9] : memref<32x1xf32, #tpu.memory_space<vmem>>, vector<32x1xf32>
    %cst_10 = arith.constant dense<0.000000e+00> : vector<32x8xf32>
    %10 = tpu.matmul %8, %7, %cst_10 {dimension_numbers = #tpu.dot_dimension_numbers<[1], [0], [0], [1], [0, 0, 1, 1], [], []>, precision = #tpu.contract_precision<fp32>} : vector<32x32xf32>, vector<32x8xf32>, vector<32x8xf32> -> vector<32x8xf32>
    %11 = vector.broadcast %9 : vector<32x1xf32> to vector<32x8xf32>
    %12 = arith.addf %10, %11 : vector<32x8xf32>
    %cst_11 = arith.constant 0.000000e+00 : f32
    %13 = vector.broadcast %cst_11 : f32 to vector<32x8xf32>
    %14 = arith.maximumf %12, %13 : vector<32x8xf32>
    %c0_12 = arith.constant 0 : index
    %c0_13 = arith.constant 0 : index
    %15 = vector.load %arg6[%c0_12, %c0_13] : memref<2x32xf32, #tpu.memory_space<vmem>>, vector<2x32xf32>
    %c0_14 = arith.constant 0 : index
    %c0_15 = arith.constant 0 : index
    %16 = vector.load %arg7[%c0_14, %c0_15] : memref<2x1xf32, #tpu.memory_space<vmem>>, vector<2x1xf32>
    %cst_16 = arith.constant dense<0.000000e+00> : vector<2x8xf32>
    %17 = tpu.matmul %15, %14, %cst_16 {dimension_numbers = #tpu.dot_dimension_numbers<[1], [0], [0], [1], [0, 0, 1, 1], [], []>, precision = #tpu.contract_precision<fp32>} : vector<2x32xf32>, vector<32x8xf32>, vector<2x8xf32> -> vector<2x8xf32>
    %18 = vector.broadcast %16 : vector<2x1xf32> to vector<2x8xf32>
    %19 = arith.addf %17, %18 : vector<2x8xf32>
    %cst_17 = arith.constant 0.000000e+00 : f32
    %20 = vector.broadcast %cst_17 : f32 to vector<2x8xf32>
    %21 = arith.maximumf %19, %20 : vector<2x8xf32>
    %22 = math.floor %21 : vector<2x8xf32>
    %c0_18 = arith.constant 0 : index
    %c0_19 = arith.constant 0 : index
    %23 = vector.load %arg8[%c0_18, %c0_19] : memref<2x8xf32, #tpu.memory_space<vmem>>, vector<2x8xf32>
    tpu.vector_store %arg8[%c0_18, %c0_19], %22 {strides = array<i32>} : memref<2x8xf32, #tpu.memory_space<vmem>>, vector<2x8xf32>,
    return
  }
  func.func @transform_0(%arg0: i32) -> (i32, i32) {
    %c0_i32 = arith.constant 0 : i32
    %c0_i32_0 = arith.constant 0 : i32
    return %c0_i32, %arg0 : i32, i32
  }
  func.func @transform_1(%arg0: i32) -> (i32, i32) {
    %c0_i32 = arith.constant 0 : i32
    %c0_i32_0 = arith.constant 0 : i32
    %c0_i32_1 = arith.constant 0 : i32
    return %c0_i32, %c0_i32_0 : i32, i32
  }
  func.func @transform_2(%arg0: i32) -> (i32, i32) {
    %c0_i32 = arith.constant 0 : i32
    %c0_i32_0 = arith.constant 0 : i32
    %c0_i32_1 = arith.constant 0 : i32
    return %c0_i32, %c0_i32_0 : i32, i32
  }
  func.func @transform_3(%arg0: i32) -> (i32, i32) {
    %c0_i32 = arith.constant 0 : i32
    %c0_i32_0 = arith.constant 0 : i32
    %c0_i32_1 = arith.constant 0 : i32
    return %c0_i32, %c0_i32_0 : i32, i32
  }
  func.func @transform_4(%arg0: i32) -> (i32, i32) {
    %c0_i32 = arith.constant 0 : i32
    %c0_i32_0 = arith.constant 0 : i32
    %c0_i32_1 = arith.constant 0 : i32
    return %c0_i32, %c0_i32_0 : i32, i32
  }
  func.func @transform_5(%arg0: i32) -> (i32, i32) {
    %c0_i32 = arith.constant 0 : i32
    %c0_i32_0 = arith.constant 0 : i32
    %c0_i32_1 = arith.constant 0 : i32
    return %c0_i32, %c0_i32_0 : i32, i32
  }
  func.func @transform_6(%arg0: i32) -> (i32, i32) {
    %c0_i32 = arith.constant 0 : i32
    %c0_i32_0 = arith.constant 0 : i32
    %c0_i32_1 = arith.constant 0 : i32
    return %c0_i32, %c0_i32_0 : i32, i32
  }
  func.func @transform_7(%arg0: i32) -> (i32, i32) {
    %c0_i32 = arith.constant 0 : i32
    %c0_i32_0 = arith.constant 0 : i32
    return %c0_i32, %arg0 : i32, i32
  }
}

</mosaic_0001>

<llo_original>
// kernel: controller_forward.1
$region0: #{controller_forward.1}
  #allocation0 [shape = 'u32[]', space=smem, size = 0x4, offset = 0x4, fixed_abs, tag = 'smem constant byte address 0x4 - core index']
  #allocation1 [shape = 'u32[144,128]{1,0:T(1,128)}', space=vmem, size = 0x12000, scoped, tag = 'internal scratch']
  %s0 = inlined_call_operand.vmem [shape: f32[7,8], index: 0, kind: input, shape index: {}]
  %s1 = inlined_call_operand.vmem [shape: f32[32,7], index: 1, kind: input, shape index: {}]
  %s2 = inlined_call_operand.vmem [shape: f32[32,1], index: 2, kind: input, shape index: {}]
  %s3 = inlined_call_operand.vmem [shape: f32[32,32], index: 3, kind: input, shape index: {}]
  %s4 = inlined_call_operand.vmem [shape: f32[32,1], index: 4, kind: input, shape index: {}]
  %s5 = inlined_call_operand.vmem [shape: f32[2,32], index: 5, kind: input, shape index: {}]
  %s6 = inlined_call_operand.vmem [shape: f32[2,1], index: 6, kind: input, shape index: {}]
  %s7 = inlined_call_operand.vmem [shape: f32[2,8], index: 7, kind: output, shape index: {}]
  %s8 = sld [smem:[#allocation0]]
  $region38: #{controller_forward.1} parent=0
    _
  %s10 = ssub.s32 1, %s8
  %s11 = scalar_select 0, %s10, %s8
  // Predicated region
  $region2: #{controller_forward.1} parent=0 // pred_check
    _
  $region3: #{controller_forward.1} parent=0 // pred_check_branch
    %13 = sbr.rel (0) target = $region5
  $region4: #{controller_forward.1} parent=0 // pred_region
    _
  $region5: #{controller_forward.1} parent=0 // pred_fallthru
    _
  // Predicated region
  $region6: #{controller_forward.1} parent=0 // pred_check
    _
  $region7: #{controller_forward.1} parent=0 // pred_check_branch
    %15 = sbr.rel (0) target = $region9
  $region8: #{controller_forward.1} parent=0 // pred_region
    _
  $region9: #{controller_forward.1} parent=0 // pred_fallthru
    _
  // Predicated region
  $region10: #{controller_forward.1} parent=0 // pred_check
    _
  $region11: #{controller_forward.1} parent=0 // pred_check_branch
    %17 = sbr.rel (0) target = $region13
  $region12: #{controller_forward.1} parent=0 // pred_region
    _
  $region13: #{controller_forward.1} parent=0 // pred_fallthru
    _
  // Predicated region
  $region14: #{controller_forward.1} parent=0 // pred_check
    _
  $region15: #{controller_forward.1} parent=0 // pred_check_branch
    %19 = sbr.rel (0) target = $region17
  $region16: #{controller_forward.1} parent=0 // pred_region
    _
  $region17: #{controller_forward.1} parent=0 // pred_fallthru
    _
  // Predicated region
  $region18: #{controller_forward.1} parent=0 // pred_check
    _
  $region19: #{controller_forward.1} parent=0 // pred_check_branch
    %21 = sbr.rel (0) target = $region21
  $region20: #{controller_forward.1} parent=0 // pred_region
    _
  $region21: #{controller_forward.1} parent=0 // pred_fallthru
    _
  // Predicated region
  $region22: #{controller_forward.1} parent=0 // pred_check
    _
  $region23: #{controller_forward.1} parent=0 // pred_check_branch
    %23 = sbr.rel (0) target = $region25
  $region24: #{controller_forward.1} parent=0 // pred_region
    _
  $region25: #{controller_forward.1} parent=0 // pred_fallthru
    _
  // Predicated region
  $region26: #{controller_forward.1} parent=0 // pred_check
    _
  $region27: #{controller_forward.1} parent=0 // pred_check_branch
    %25 = sbr.rel (0) target = $region29
  $region28: #{controller_forward.1} parent=0 // pred_region
    _
  $region29: #{controller_forward.1} parent=0 // pred_fallthru
    _
  %v26 = vld [vmem:[%s0] sm:$0x7f]
  %v27 = vld [vmem:[%s1] sm:$0xff]
  %v28 = vld [vmem:[%s1 + $0x8] sm:$0xff]
  %v29 = vld [vmem:[%s1 + $0x10] sm:$0xff]
  %v30 = vld [vmem:[%s1 + $0x18] sm:$0xff]
  %v31 = vld [vmem:[%s2] sm:$0xff]
  %v32 = vld [vmem:[%s2 + $0x8] sm:$0xff]
  %v33 = vld [vmem:[%s2 + $0x10] sm:$0xff]
  %v34 = vld [vmem:[%s2 + $0x18] sm:$0xff]
  %36 = vset.pattern.permute.xlu0 0
  %37 = vperm.xlu0 %36, %v31
  %v38 = vpop.permute.xlu0 %37
  %41 = vset.pattern.permute.xlu0 0
  %42 = vperm.xlu0 %41, %v32
  %v43 = vpop.permute.xlu0 %42
  %46 = vset.pattern.permute.xlu0 0
  %47 = vperm.xlu0 %46, %v33
  %v48 = vpop.permute.xlu0 %47
  %51 = vset.pattern.permute.xlu0 0
  %52 = vperm.xlu0 %51, %v34
  %v53 = vpop.permute.xlu0 %52
  %vm55 = vcmask 56320
  %v57 = vsel %vm55, %v27, 0
  %v60 = vsel %vm55, %v28, 0
  %v63 = vsel %vm55, %v29, 0
  %v66 = vsel %vm55, %v30, 0
  %vm68 = vcmask 1046528
  %v70 = vsel %vm68, %v26, 0
  %72 = vmatprep.subr.mxu0 0.0
  %73 = vmatpush1.msra.mxu0 0.0
  %74 = vmatprep.subr.mxu0 0.0
  %75 = vmatpush1.msra.mxu0 0.0
  %76 = vmatprep.subr.mxu0 0.0
  %77 = vmatpush1.msra.mxu0 0.0
  %78 = vmatprep.subr.mxu0 0.0
  %79 = vmatpush1.msra.mxu0 0.0
  %80 = vmatprep.subr.mxu0 0.0
  %81 = vmatpush1.msra.mxu0 0.0
  %82 = vmatprep.subr.mxu0 0.0
  %83 = vmatpush1.msra.mxu0 0.0
  %84 = vmatprep.subr.mxu0 0.0
  %85 = vmatpush1.msra.mxu0 0.0
  %86 = vmatprep.subr.mxu0 0.0
  %87 = vmatpush1.msra.mxu0 0.0
  %88 = vmatprep.subr.mxu0 0.0
  %89 = vmatpush1.msra.mxu0 0.0
  %90 = vmatprep.subr.mxu0 0.0
  %91 = vmatpush1.msra.mxu0 0.0
  %92 = vmatprep.subr.mxu0 0.0
  %93 = vmatpush1.msra.mxu0 0.0
  %94 = vmatprep.subr.mxu0 0.0
  %95 = vmatpush1.msra.mxu0 0.0
  %96 = vmatprep.subr.mxu0 0.0
  %97 = vmatpush1.msra.mxu0 0.0
  %98 = vmatprep.subr.mxu0 0.0
  %99 = vmatpush1.msra.mxu0 0.0
  %100 = vmatprep.subr.mxu0 0.0
  %101 = vmatpush1.msra.mxu0 0.0
  %102 = vmatprep.subr.mxu0 0.0
  %v103 = vand.u32 %v70, 4294901760
  %104 = vmatpush1.msra.mxu0 %v103
  %105 = vmatprep.subr.mxu0 0.0
  %106 = vmatpush2.msra.mxu0 0.0
  %107 = vmatprep.subr.mxu0 0.0
  %108 = vmatpush2.msra.mxu0 0.0
  %109 = vmatprep.subr.mxu0 0.0
  %110 = vmatpush2.msra.mxu0 0.0
  %111 = vmatprep.subr.mxu0 0.0
  %112 = vmatpush2.msra.mxu0 0.0
  %113 = vmatprep.subr.mxu0 0.0
  %114 = vmatpush2.msra.mxu0 0.0
  %115 = vmatprep.subr.mxu0 0.0
  %116 = vmatpush2.msra.mxu0 0.0
  %117 = vmatprep.subr.mxu0 0.0
  %118 = vmatpush2.msra.mxu0 0.0
  %119 = vmatprep.subr.mxu0 0.0
  %120 = vmatpush2.msra.mxu0 0.0
  %121 = vmatprep.subr.mxu0 0.0
  %122 = vmatpush2.msra.mxu0 0.0
  %123 = vmatprep.subr.mxu0 0.0
  %124 = vmatpush2.msra.mxu0 0.0
  %125 = vmatprep.subr.mxu0 0.0
  %126 = vmatpush2.msra.mxu0 0.0
  %127 = vmatprep.subr.mxu0 0.0
  %128 = vmatpush2.msra.mxu0 0.0
  %129 = vmatprep.subr.mxu0 0.0
  %130 = vmatpush2.msra.mxu0 0.0
  %131 = vmatprep.subr.mxu0 0.0
  %132 = vmatpush2.msra.mxu0 0.0
  %133 = vmatprep.subr.mxu0 0.0
  %134 = vmatpush2.msra.mxu0 0.0
  %135 = vmatprep.subr.mxu0 0.0
  %136 = vmatpush2.msra.mxu0 0.0
  %137 = vmatprep.mubr.f32.mxu0 0.0
  %v138 = vand.u32 %v57, 4294901760
  %v139 = vsub.f32 %v57, %v138
  %v140 = vand.u32 %v139, 4294901760
  %v141 = vsub.f32 %v139, %v140
  %v142 = vand.u32 %v141, 4294901760
  %143 = vmatmul.mubr.f32.gmra.mxu0 %v142
  %v144 = vpop.f32.mrf.mxu0
  %v145 = vadd.f32 %v38, %v144
  %v146 = vpop.f32.mrf.mxu0
  %147 = vmatprep.mubr.f32.mxu0 0.0
  %v148 = vand.u32 %v60, 4294901760
  %v149 = vsub.f32 %v60, %v148
  %v150 = vand.u32 %v149, 4294901760
  %v151 = vsub.f32 %v149, %v150
  %v152 = vand.u32 %v151, 4294901760
  %153 = vmatmul.mubr.f32.gmra.mxu0 %v152
  %v154 = vpop.f32.mrf.mxu0
  %v155 = vadd.f32 %v43, %v154
  %v156 = vpop.f32.mrf.mxu0
  %157 = vmatprep.mubr.f32.mxu0 0.0
  %v158 = vand.u32 %v63, 4294901760
  %v159 = vsub.f32 %v63, %v158
  %v160 = vand.u32 %v159, 4294901760
  %v161 = vsub.f32 %v159, %v160
  %v162 = vand.u32 %v161, 4294901760
  %163 = vmatmul.mubr.f32.gmra.mxu0 %v162
  %v164 = vpop.f32.mrf.mxu0
  %v165 = vadd.f32 %v48, %v164
  %v166 = vpop.f32.mrf.mxu0
  %167 = vmatprep.mubr.f32.mxu0 0.0
  %v168 = vand.u32 %v66, 4294901760
  %v169 = vsub.f32 %v66, %v168
  %v170 = vand.u32 %v169, 4294901760
  %v171 = vsub.f32 %v169, %v170
  %v172 = vand.u32 %v171, 4294901760
  %173 = vmatmul.mubr.f32.gmra.mxu0 %v172
  %v174 = vpop.f32.mrf.mxu0
  %v175 = vadd.f32 %v53, %v174
  %v176 = vpop.f32.mrf.mxu0
  %177 = vdwg.mxu0
  %178 = vmatprep.subr.mxu0 0.0
  %179 = vmatpush1.msra.mxu0 0.0
  %180 = vmatprep.subr.mxu0 0.0
  %181 = vmatpush1.msra.mxu0 0.0
  %182 = vmatprep.subr.mxu0 0.0
  %183 = vmatpush1.msra.mxu0 0.0
  %184 = vmatprep.subr.mxu0 0.0
  %185 = vmatpush1.msra.mxu0 0.0
  %186 = vmatprep.subr.mxu0 0.0
  %187 = vmatpush1.msra.mxu0 0.0
  %188 = vmatprep.subr.mxu0 0.0
  %189 = vmatpush1.msra.mxu0 0.0
  %190 = vmatprep.subr.mxu0 0.0
  %191 = vmatpush1.msra.mxu0 0.0
  %192 = vmatprep.subr.mxu0 0.0
  %193 = vmatpush1.msra.mxu0 0.0
  %194 = vmatprep.subr.mxu0 0.0
  %195 = vmatpush1.msra.mxu0 0.0
  %196 = vmatprep.subr.mxu0 0.0
  %197 = vmatpush1.msra.mxu0 0.0
  %198 = vmatprep.subr.mxu0 0.0
  %199 = vmatpush1.msra.mxu0 0.0
  %200 = vmatprep.subr.mxu0 0.0
  %201 = vmatpush1.msra.mxu0 0.0
  %202 = vmatprep.subr.mxu0 0.0
  %203 = vmatpush1.msra.mxu0 0.0
  %204 = vmatprep.subr.mxu0 0.0
  %205 = vmatpush1.msra.mxu0 0.0
  %206 = vmatprep.subr.mxu0 0.0
  %207 = vmatpush1.msra.mxu0 0.0
  %208 = vmatprep.subr.mxu0 0.0
  %v209 = vand.u32 %v70, 4294901760
  %v210 = vsub.f32 %v70, %v209
  %v211 = vand.u32 %v210, 4294901760
  %v212 = vsub.f32 %v210, %v211
  %v213 = vand.u32 %v212, 4294901760
  %214 = vmatpush1.msra.mxu0 %v213
  %215 = vmatprep.subr.mxu0 0.0
  %216 = vmatpush2.msra.mxu0 0.0
  %217 = vmatprep.subr.mxu0 0.0
  %218 = vmatpush2.msra.mxu0 0.0
  %219 = vmatprep.subr.mxu0 0.0
  %220 = vmatpush2.msra.mxu0 0.0
  %221 = vmatprep.subr.mxu0 0.0
  %222 = vmatpush2.msra.mxu0 0.0
  %223 = vmatprep.subr.mxu0 0.0
  %224 = vmatpush2.msra.mxu0 0.0
  %225 = vmatprep.subr.mxu0 0.0
  %226 = vmatpush2.msra.mxu0 0.0
  %227 = vmatprep.subr.mxu0 0.0
  %228 = vmatpush2.msra.mxu0 0.0
  %229 = vmatprep.subr.mxu0 0.0
  %230 = vmatpush2.msra.mxu0 0.0
  %231 = vmatprep.subr.mxu0 0.0
  %232 = vmatpush2.msra.mxu0 0.0
  %233 = vmatprep.subr.mxu0 0.0
  %234 = vmatpush2.msra.mxu0 0.0
  %235 = vmatprep.subr.mxu0 0.0
  %236 = vmatpush2.msra.mxu0 0.0
  %237 = vmatprep.subr.mxu0 0.0
  %238 = vmatpush2.msra.mxu0 0.0
  %239 = vmatprep.subr.mxu0 0.0
  %240 = vmatpush2.msra.mxu0 0.0
  %241 = vmatprep.subr.mxu0 0.0
  %242 = vmatpush2.msra.mxu0 0.0
  %243 = vmatprep.subr.mxu0 0.0
  %244 = vmatpush2.msra.mxu0 0.0
  %245 = vmatprep.subr.mxu0 0.0
  %246 = vmatpush2.msra.mxu0 0.0
  %247 = vmatprep.mubr.f32.mxu0 0.0
  %v248 = vand.u32 %v57, 4294901760
  %249 = vmatmul.mubr.f32.gmra.mxu0 %v248
  %v250 = vpop.f32.mrf.mxu0
  %v251 = vadd.f32 %v145, %v250
  %v252 = vpop.f32.mrf.mxu0
  %253 = vmatprep.mubr.f32.mxu0 0.0
  %v254 = vand.u32 %v60, 4294901760
  %255 = vmatmul.mubr.f32.gmra.mxu0 %v254
  %v256 = vpop.f32.mrf.mxu0
  %v257 = vadd.f32 %v155, %v256
  %v258 = vpop.f32.mrf.mxu0
  %259 = vmatprep.mubr.f32.mxu0 0.0
  %v260 = vand.u32 %v63, 4294901760
  %261 = vmatmul.mubr.f32.gmra.mxu0 %v260
  %v262 = vpop.f32.mrf.mxu0
  %v263 = vadd.f32 %v165, %v262
  %v264 = vpop.f32.mrf.mxu0
  %265 = vmatprep.mubr.f32.mxu0 0.0
  %v266 = vand.u32 %v66, 4294901760
  %267 = vmatmul.mubr.f32.gmra.mxu0 %v266
  %v268 = vpop.f32.mrf.mxu0
  %v269 = vadd.f32 %v175, %v268
  %v270 = vpop.f32.mrf.mxu0
  %271 = vdwg.mxu0
  %272 = vmatprep.subr.mxu0 0.0
  %273 = vmatpush1.msra.mxu0 0.0
  %274 = vmatprep.subr.mxu0 0.0
  %275 = vmatpush1.msra.mxu0 0.0
  %276 = vmatprep.subr.mxu0 0.0
  %277 = vmatpush1.msra.mxu0 0.0
  %278 = vmatprep.subr.mxu0 0.0
  %279 = vmatpush1.msra.mxu0 0.0
  %280 = vmatprep.subr.mxu0 0.0
  %281 = vmatpush1.msra.mxu0 0.0
  %282 = vmatprep.subr.mxu0 0.0
  %283 = vmatpush1.msra.mxu0 0.0
  %284 = vmatprep.subr.mxu0 0.0
  %285 = vmatpush1.msra.mxu0 0.0
  %286 = vmatprep.subr.mxu0 0.0
  %287 = vmatpush1.msra.mxu0 0.0
  %288 = vmatprep.subr.mxu0 0.0
  %289 = vmatpush1.msra.mxu0 0.0
  %290 = vmatprep.subr.mxu0 0.0
  %291 = vmatpush1.msra.mxu0 0.0
  %292 = vmatprep.subr.mxu0 0.0
  %293 = vmatpush1.msra.mxu0 0.0
  %294 = vmatprep.subr.mxu0 0.0
  %295 = vmatpush1.msra.mxu0 0.0
  %296 = vmatprep.subr.mxu0 0.0
  %297 = vmatpush1.msra.mxu0 0.0
  %298 = vmatprep.subr.mxu0 0.0
  %299 = vmatpush1.msra.mxu0 0.0
  %300 = vmatprep.subr.mxu0 0.0
  %301 = vmatpush1.msra.mxu0 0.0
  %302 = vmatprep.subr.mxu0 0.0
  %v303 = vand.u32 %v70, 4294901760
  %v304 = vsub.f32 %v70, %v303
  %305 = vmatpush1.msra.mxu0 %v304
  %306 = vmatprep.subr.mxu0 0.0
  %307 = vmatpush2.msra.mxu0 0.0
  %308 = vmatprep.subr.mxu0 0.0
  %309 = vmatpush2.msra.mxu0 0.0
  %310 = vmatprep.subr.mxu0 0.0
  %311 = vmatpush2.msra.mxu0 0.0
  %312 = vmatprep.subr.mxu0 0.0
  %313 = vmatpush2.msra.mxu0 0.0
  %314 = vmatprep.subr.mxu0 0.0
  %315 = vmatpush2.msra.mxu0 0.0
  %316 = vmatprep.subr.mxu0 0.0
  %317 = vmatpush2.msra.mxu0 0.0
  %318 = vmatprep.subr.mxu0 0.0
  %319 = vmatpush2.msra.mxu0 0.0
  %320 = vmatprep.subr.mxu0 0.0
  %321 = vmatpush2.msra.mxu0 0.0
  %322 = vmatprep.subr.mxu0 0.0
  %323 = vmatpush2.msra.mxu0 0.0
  %324 = vmatprep.subr.mxu0 0.0
  %325 = vmatpush2.msra.mxu0 0.0
  %326 = vmatprep.subr.mxu0 0.0
  %327 = vmatpush2.msra.mxu0 0.0
  %328 = vmatprep.subr.mxu0 0.0
  %329 = vmatpush2.msra.mxu0 0.0
  %330 = vmatprep.subr.mxu0 0.0
  %331 = vmatpush2.msra.mxu0 0.0
  %332 = vmatprep.subr.mxu0 0.0
  %333 = vmatpush2.msra.mxu0 0.0
  %334 = vmatprep.subr.mxu0 0.0
  %335 = vmatpush2.msra.mxu0 0.0
  %336 = vmatprep.subr.mxu0 0.0
  %337 = vmatpush2.msra.mxu0 0.0
  %338 = vmatprep.mubr.f32.mxu0 0.0
  %v339 = vand.u32 %v57, 4294901760
  %v340 = vsub.f32 %v57, %v339
  %341 = vmatmul.mubr.f32.gmra.mxu0 %v340
  %v342 = vpop.f32.mrf.mxu0
  %v343 = vadd.f32 %v251, %v342
  %v344 = vpop.f32.mrf.mxu0
  %345 = vmatprep.mubr.f32.mxu0 0.0
  %v346 = vand.u32 %v60, 4294901760
  %v347 = vsub.f32 %v60, %v346
  %348 = vmatmul.mubr.f32.gmra.mxu0 %v347
  %v349 = vpop.f32.mrf.mxu0
  %v350 = vadd.f32 %v257, %v349
  %v351 = vpop.f32.mrf.mxu0
  %352 = vmatprep.mubr.f32.mxu0 0.0
  %v353 = vand.u32 %v63, 4294901760
  %v354 = vsub.f32 %v63, %v353
  %355 = vmatmul.mubr.f32.gmra.mxu0 %v354
  %v356 = vpop.f32.mrf.mxu0
  %v357 = vadd.f32 %v263, %v356
  %v358 = vpop.f32.mrf.mxu0
  %359 = vmatprep.mubr.f32.mxu0 0.0
  %v360 = vand.u32 %v66, 4294901760
  %v361 = vsub.f32 %v66, %v360
  %362 = vmatmul.mubr.f32.gmra.mxu0 %v361
  %v363 = vpop.f32.mrf.mxu0
  %v364 = vadd.f32 %v269, %v363
  %v365 = vpop.f32.mrf.mxu0
  %366 = vdwg.mxu0
  %367 = vmatprep.subr.mxu0 0.0
  %368 = vmatpush1.msra.mxu0 0.0
  %369 = vmatprep.subr.mxu0 0.0
  %370 = vmatpush1.msra.mxu0 0.0
  %371 = vmatprep.subr.mxu0 0.0
  %372 = vmatpush1.msra.mxu0 0.0
  %373 = vmatprep.subr.mxu0 0.0
  %374 = vmatpush1.msra.mxu0 0.0
  %375 = vmatprep.subr.mxu0 0.0
  %376 = vmatpush1.msra.mxu0 0.0
  %377 = vmatprep.subr.mxu0 0.0
  %378 = vmatpush1.msra.mxu0 0.0
  %379 = vmatprep.subr.mxu0 0.0
  %380 = vmatpush1.msra.mxu0 0.0
  %381 = vmatprep.subr.mxu0 0.0
  %382 = vmatpush1.msra.mxu0 0.0
  %383 = vmatprep.subr.mxu0 0.0
  %384 = vmatpush1.msra.mxu0 0.0
  %385 = vmatprep.subr.mxu0 0.0
  %386 = vmatpush1.msra.mxu0 0.0
  %387 = vmatprep.subr.mxu0 0.0
  %388 = vmatpush1.msra.mxu0 0.0
  %389 = vmatprep.subr.mxu0 0.0
  %390 = vmatpush1.msra.mxu0 0.0
  %391 = vmatprep.subr.mxu0 0.0
  %392 = vmatpush1.msra.mxu0 0.0
  %393 = vmatprep.subr.mxu0 0.0
  %394 = vmatpush1.msra.mxu0 0.0
  %395 = vmatprep.subr.mxu0 0.0
  %396 = vmatpush1.msra.mxu0 0.0
  %397 = vmatprep.subr.mxu0 0.0
  %v398 = vand.u32 %v70, 4294901760
  %399 = vmatpush1.msra.mxu0 %v398
  %400 = vmatprep.subr.mxu0 0.0
  %401 = vmatpush2.msra.mxu0 0.0
  %402 = vmatprep.subr.mxu0 0.0
  %403 = vmatpush2.msra.mxu0 0.0
  %404 = vmatprep.subr.mxu0 0.0
  %405 = vmatpush2.msra.mxu0 0.0
  %406 = vmatprep.subr.mxu0 0.0
  %407 = vmatpush2.msra.mxu0 0.0
  %408 = vmatprep.subr.mxu0 0.0
  %409 = vmatpush2.msra.mxu0 0.0
  %410 = vmatprep.subr.mxu0 0.0
  %411 = vmatpush2.msra.mxu0 0.0
  %412 = vmatprep.subr.mxu0 0.0
  %413 = vmatpush2.msra.mxu0 0.0
  %414 = vmatprep.subr.mxu0 0.0
  %415 = vmatpush2.msra.mxu0 0.0
  %416 = vmatprep.subr.mxu0 0.0
  %417 = vmatpush2.msra.mxu0 0.0
  %418 = vmatprep.subr.mxu0 0.0
  %419 = vmatpush2.msra.mxu0 0.0
  %420 = vmatprep.subr.mxu0 0.0
  %421 = vmatpush2.msra.mxu0 0.0
  %422 = vmatprep.subr.mxu0 0.0
  %423 = vmatpush2.msra.mxu0 0.0
  %424 = vmatprep.subr.mxu0 0.0
  %425 = vmatpush2.msra.mxu0 0.0
  %426 = vmatprep.subr.mxu0 0.0
  %427 = vmatpush2.msra.mxu0 0.0
  %428 = vmatprep.subr.mxu0 0.0
  %429 = vmatpush2.msra.mxu0 0.0
  %430 = vmatprep.subr.mxu0 0.0
  %431 = vmatpush2.msra.mxu0 0.0
  %432 = vmatprep.mubr.f32.mxu0 0.0
  %v433 = vand.u32 %v57, 4294901760
  %v434 = vsub.f32 %v57, %v433
  %v435 = vand.u32 %v434, 4294901760
  %436 = vmatmul.mubr.f32.gmra.mxu0 %v435
  %v437 = vpop.f32.mrf.mxu0
  %v438 = vadd.f32 %v343, %v437
  %v439 = vpop.f32.mrf.mxu0
  %440 = vmatprep.mubr.f32.mxu0 0.0
  %v441 = vand.u32 %v60, 4294901760
  %v442 = vsub.f32 %v60, %v441
  %v443 = vand.u32 %v442, 4294901760
  %444 = vmatmul.mubr.f32.gmra.mxu0 %v443
  %v445 = vpop.f32.mrf.mxu0
  %v446 = vadd.f32 %v350, %v445
  %v447 = vpop.f32.mrf.mxu0
  %448 = vmatprep.mubr.f32.mxu0 0.0
  %v449 = vand.u32 %v63, 4294901760
  %v450 = vsub.f32 %v63, %v449
  %v451 = vand.u32 %v450, 4294901760
  %452 = vmatmul.mubr.f32.gmra.mxu0 %v451
  %v453 = vpop.f32.mrf.mxu0
  %v454 = vadd.f32 %v357, %v453
  %v455 = vpop.f32.mrf.mxu0
  %456 = vmatprep.mubr.f32.mxu0 0.0
  %v457 = vand.u32 %v66, 4294901760
  %v458 = vsub.f32 %v66, %v457
  %v459 = vand.u32 %v458, 4294901760
  %460 = vmatmul.mubr.f32.gmra.mxu0 %v459
  %v461 = vpop.f32.mrf.mxu0
  %v462 = vadd.f32 %v364, %v461
  %v463 = vpop.f32.mrf.mxu0
  %464 = vdwg.mxu0
  %465 = vmatprep.subr.mxu0 0.0
  %466 = vmatpush1.msra.mxu0 0.0
  %467 = vmatprep.subr.mxu0 0.0
  %468 = vmatpush1.msra.mxu0 0.0
  %469 = vmatprep.subr.mxu0 0.0
  %470 = vmatpush1.msra.mxu0 0.0
  %471 = vmatprep.subr.mxu0 0.0
  %472 = vmatpush1.msra.mxu0 0.0
  %473 = vmatprep.subr.mxu0 0.0
  %474 = vmatpush1.msra.mxu0 0.0
  %475 = vmatprep.subr.mxu0 0.0
  %476 = vmatpush1.msra.mxu0 0.0
  %477 = vmatprep.subr.mxu0 0.0
  %478 = vmatpush1.msra.mxu0 0.0
  %479 = vmatprep.subr.mxu0 0.0
  %480 = vmatpush1.msra.mxu0 0.0
  %481 = vmatprep.subr.mxu0 0.0
  %482 = vmatpush1.msra.mxu0 0.0
  %483 = vmatprep.subr.mxu0 0.0
  %484 = vmatpush1.msra.mxu0 0.0
  %485 = vmatprep.subr.mxu0 0.0
  %486 = vmatpush1.msra.mxu0 0.0
  %487 = vmatprep.subr.mxu0 0.0
  %488 = vmatpush1.msra.mxu0 0.0
  %489 = vmatprep.subr.mxu0 0.0
  %490 = vmatpush1.msra.mxu0 0.0
  %491 = vmatprep.subr.mxu0 0.0
  %492 = vmatpush1.msra.mxu0 0.0
  %493 = vmatprep.subr.mxu0 0.0
  %494 = vmatpush1.msra.mxu0 0.0
  %495 = vmatprep.subr.mxu0 0.0
  %v496 = vand.u32 %v70, 4294901760
  %v497 = vsub.f32 %v70, %v496
  %v498 = vand.u32 %v497, 4294901760
  %499 = vmatpush1.msra.mxu0 %v498
  %500 = vmatprep.subr.mxu0 0.0
  %501 = vmatpush2.msra.mxu0 0.0
  %502 = vmatprep.subr.mxu0 0.0
  %503 = vmatpush2.msra.mxu0 0.0
  %504 = vmatprep.subr.mxu0 0.0
  %505 = vmatpush2.msra.mxu0 0.0
  %506 = vmatprep.subr.mxu0 0.0
  %507 = vmatpush2.msra.mxu0 0.0
  %508 = vmatprep.subr.mxu0 0.0
  %509 = vmatpush2.msra.mxu0 0.0
  %510 = vmatprep.subr.mxu0 0.0
  %511 = vmatpush2.msra.mxu0 0.0
  %512 = vmatprep.subr.mxu0 0.0
  %513 = vmatpush2.msra.mxu0 0.0
  %514 = vmatprep.subr.mxu0 0.0
  %515 = vmatpush2.msra.mxu0 0.0
  %516 = vmatprep.subr.mxu0 0.0
  %517 = vmatpush2.msra.mxu0 0.0
  %518 = vmatprep.subr.mxu0 0.0
  %519 = vmatpush2.msra.mxu0 0.0
  %520 = vmatprep.subr.mxu0 0.0
  %521 = vmatpush2.msra.mxu0 0.0
  %522 = vmatprep.subr.mxu0 0.0
  %523 = vmatpush2.msra.mxu0 0.0
  %524 = vmatprep.subr.mxu0 0.0
  %525 = vmatpush2.msra.mxu0 0.0
  %526 = vmatprep.subr.mxu0 0.0
  %527 = vmatpush2.msra.mxu0 0.0
  %528 = vmatprep.subr.mxu0 0.0
  %529 = vmatpush2.msra.mxu0 0.0
  %530 = vmatprep.subr.mxu0 0.0
  %531 = vmatpush2.msra.mxu0 0.0
  %532 = vmatprep.mubr.f32.mxu0 0.0
  %v533 = vand.u32 %v57, 4294901760
  %534 = vmatmul.mubr.f32.gmra.mxu0 %v533
  %v535 = vpop.f32.mrf.mxu0
  %v536 = vadd.f32 %v438, %v535
  %v537 = vpop.f32.mrf.mxu0
  %538 = vmatprep.mubr.f32.mxu0 0.0
  %v539 = vand.u32 %v60, 4294901760
  %540 = vmatmul.mubr.f32.gmra.mxu0 %v539
  %v541 = vpop.f32.mrf.mxu0
  %v542 = vadd.f32 %v446, %v541
  %v543 = vpop.f32.mrf.mxu0
  %544 = vmatprep.mubr.f32.mxu0 0.0
  %v545 = vand.u32 %v63, 4294901760
  %546 = vmatmul.mubr.f32.gmra.mxu0 %v545
  %v547 = vpop.f32.mrf.mxu0
  %v548 = vadd.f32 %v454, %v547
  %v549 = vpop.f32.mrf.mxu0
  %550 = vmatprep.mubr.f32.mxu0 0.0
  %v551 = vand.u32 %v66, 4294901760
  %552 = vmatmul.mubr.f32.gmra.mxu0 %v551
  %v553 = vpop.f32.mrf.mxu0
  %v554 = vadd.f32 %v462, %v553
  %v555 = vpop.f32.mrf.mxu0
  %556 = vdwg.mxu0
  %557 = vmatprep.subr.mxu0 0.0
  %558 = vmatpush1.msra.mxu0 0.0
  %559 = vmatprep.subr.mxu0 0.0
  %560 = vmatpush1.msra.mxu0 0.0
  %561 = vmatprep.subr.mxu0 0.0
  %562 = vmatpush1.msra.mxu0 0.0
  %563 = vmatprep.subr.mxu0 0.0
  %564 = vmatpush1.msra.mxu0 0.0
  %565 = vmatprep.subr.mxu0 0.0
  %566 = vmatpush1.msra.mxu0 0.0
  %567 = vmatprep.subr.mxu0 0.0
  %568 = vmatpush1.msra.mxu0 0.0
  %569 = vmatprep.subr.mxu0 0.0
  %570 = vmatpush1.msra.mxu0 0.0
  %571 = vmatprep.subr.mxu0 0.0
  %572 = vmatpush1.msra.mxu0 0.0
  %573 = vmatprep.subr.mxu0 0.0
  %574 = vmatpush1.msra.mxu0 0.0
  %575 = vmatprep.subr.mxu0 0.0
  %576 = vmatpush1.msra.mxu0 0.0
  %577 = vmatprep.subr.mxu0 0.0
  %578 = vmatpush1.msra.mxu0 0.0
  %579 = vmatprep.subr.mxu0 0.0
  %580 = vmatpush1.msra.mxu0 0.0
  %581 = vmatprep.subr.mxu0 0.0
  %582 = vmatpush1.msra.mxu0 0.0
  %583 = vmatprep.subr.mxu0 0.0
  %584 = vmatpush1.msra.mxu0 0.0
  %585 = vmatprep.subr.mxu0 0.0
  %586 = vmatpush1.msra.mxu0 0.0
  %587 = vmatprep.subr.mxu0 0.0
  %v588 = vand.u32 %v70, 4294901760
  %589 = vmatpush1.msra.mxu0 %v588
  %590 = vmatprep.subr.mxu0 0.0
  %591 = vmatpush2.msra.mxu0 0.0
  %592 = vmatprep.subr.mxu0 0.0
  %593 = vmatpush2.msra.mxu0 0.0
  %594 = vmatprep.subr.mxu0 0.0
  %595 = vmatpush2.msra.mxu0 0.0
  %596 = vmatprep.subr.mxu0 0.0
  %597 = vmatpush2.msra.mxu0 0.0
  %598 = vmatprep.subr.mxu0 0.0
  %599 = vmatpush2.msra.mxu0 0.0
  %600 = vmatprep.subr.mxu0 0.0
  %601 = vmatpush2.msra.mxu0 0.0
  %602 = vmatprep.subr.mxu0 0.0
  %603 = vmatpush2.msra.mxu0 0.0
  %604 = vmatprep.subr.mxu0 0.0
  %605 = vmatpush2.msra.mxu0 0.0
  %606 = vmatprep.subr.mxu0 0.0
  %607 = vmatpush2.msra.mxu0 0.0
  %608 = vmatprep.subr.mxu0 0.0
  %609 = vmatpush2.msra.mxu0 0.0
  %610 = vmatprep.subr.mxu0 0.0
  %611 = vmatpush2.msra.mxu0 0.0
  %612 = vmatprep.subr.mxu0 0.0
  %613 = vmatpush2.msra.mxu0 0.0
  %614 = vmatprep.subr.mxu0 0.0
  %615 = vmatpush2.msra.mxu0 0.0
  %616 = vmatprep.subr.mxu0 0.0
  %617 = vmatpush2.msra.mxu0 0.0
  %618 = vmatprep.subr.mxu0 0.0
  %619 = vmatpush2.msra.mxu0 0.0
  %620 = vmatprep.subr.mxu0 0.0
  %621 = vmatpush2.msra.mxu0 0.0
  %622 = vmatprep.mubr.f32.mxu0 0.0
  %v623 = vand.u32 %v57, 4294901760
  %624 = vmatmul.mubr.f32.gmra.mxu0 %v623
  %v625 = vpop.f32.mrf.mxu0
  %v626 = vadd.f32 %v536, %v625
  %v627 = vpop.f32.mrf.mxu0
  %628 = vmatprep.mubr.f32.mxu0 0.0
  %v629 = vand.u32 %v60, 4294901760
  %630 = vmatmul.mubr.f32.gmra.mxu0 %v629
  %v631 = vpop.f32.mrf.mxu0
  %v632 = vadd.f32 %v542, %v631
  %v633 = vpop.f32.mrf.mxu0
  %634 = vmatprep.mubr.f32.mxu0 0.0
  %v635 = vand.u32 %v63, 4294901760
  %636 = vmatmul.mubr.f32.gmra.mxu0 %v635
  %v637 = vpop.f32.mrf.mxu0
  %v638 = vadd.f32 %v548, %v637
  %v639 = vpop.f32.mrf.mxu0
  %640 = vmatprep.mubr.f32.mxu0 0.0
  %v641 = vand.u32 %v66, 4294901760
  %642 = vmatmul.mubr.f32.gmra.mxu0 %v641
  %v643 = vpop.f32.mrf.mxu0
  %v644 = vadd.f32 %v554, %v643
  %v645 = vpop.f32.mrf.mxu0
  %646 = vdwg.mxu0
  %v647 = vmax.f32 %v626, 0.0
  %v648 = vmax.f32 %v632, 0.0
  %v649 = vmax.f32 %v638, 0.0
  %v650 = vmax.f32 %v644, 0.0
  %v651 = vld [vmem:[%s3] sm:$0xff]
  %v652 = vld [vmem:[%s3 + $0x8] sm:$0xff]
  %v653 = vld [vmem:[%s3 + $0x10] sm:$0xff]
  %v654 = vld [vmem:[%s3 + $0x18] sm:$0xff]
  %v655 = vld [vmem:[%s4] sm:$0xff]
  %v656 = vld [vmem:[%s4 + $0x8] sm:$0xff]
  %v657 = vld [vmem:[%s4 + $0x10] sm:$0xff]
  %v658 = vld [vmem:[%s4 + $0x18] sm:$0xff]
  %660 = vset.pattern.permute.xlu0 0
  %661 = vperm.xlu0 %660, %v655
  %v662 = vpop.permute.xlu0 %661
  %665 = vset.pattern.permute.xlu0 0
  %666 = vperm.xlu0 %665, %v656
  %v667 = vpop.permute.xlu0 %666
  %670 = vset.pattern.permute.xlu0 0
  %671 = vperm.xlu0 %670, %v657
  %v672 = vpop.permute.xlu0 %671
  %675 = vset.pattern.permute.xlu0 0
  %676 = vperm.xlu0 %675, %v658
  %v677 = vpop.permute.xlu0 %676
  %vm679 = vcmask 261120
  %v681 = vsel %vm679, %v651, 0
  %v684 = vsel %vm679, %v652, 0
  %v687 = vsel %vm679, %v653, 0
  %v690 = vsel %vm679, %v654, 0
  %692 = vmatprep.subr.mxu0 0.0
  %693 = vmatpush1.msra.mxu0 0.0
  %694 = vmatprep.subr.mxu0 0.0
  %695 = vmatpush1.msra.mxu0 0.0
  %696 = vmatprep.subr.mxu0 0.0
  %697 = vmatpush1.msra.mxu0 0.0
  %698 = vmatprep.subr.mxu0 0.0
  %699 = vmatpush1.msra.mxu0 0.0
  %700 = vmatprep.subr.mxu0 0.0
  %701 = vmatpush1.msra.mxu0 0.0
  %702 = vmatprep.subr.mxu0 0.0
  %703 = vmatpush1.msra.mxu0 0.0
  %704 = vmatprep.subr.mxu0 0.0
  %705 = vmatpush1.msra.mxu0 0.0
  %706 = vmatprep.subr.mxu0 0.0
  %707 = vmatpush1.msra.mxu0 0.0
  %708 = vmatprep.subr.mxu0 0.0
  %709 = vmatpush1.msra.mxu0 0.0
  %710 = vmatprep.subr.mxu0 0.0
  %711 = vmatpush1.msra.mxu0 0.0
  %712 = vmatprep.subr.mxu0 0.0
  %713 = vmatpush1.msra.mxu0 0.0
  %714 = vmatprep.subr.mxu0 0.0
  %715 = vmatpush1.msra.mxu0 0.0
  %716 = vmatprep.subr.mxu0 0.0
  %v717 = vand.u32 %v650, 4294901760
  %718 = vmatpush1.msra.mxu0 %v717
  %719 = vmatprep.subr.mxu0 0.0
  %v720 = vand.u32 %v649, 4294901760
  %721 = vmatpush1.msra.mxu0 %v720
  %722 = vmatprep.subr.mxu0 0.0
  %v723 = vand.u32 %v648, 4294901760
  %724 = vmatpush1.msra.mxu0 %v723
  %725 = vmatprep.subr.mxu0 0.0
  %v726 = vand.u32 %v647, 4294901760
  %727 = vmatpush1.msra.mxu0 %v726
  %728 = vmatprep.subr.mxu0 0.0
  %729 = vmatpush2.msra.mxu0 0.0
  %730 = vmatprep.subr.mxu0 0.0
  %731 = vmatpush2.msra.mxu0 0.0
  %732 = vmatprep.subr.mxu0 0.0
  %733 = vmatpush2.msra.mxu0 0.0
  %734 = vmatprep.subr.mxu0 0.0
  %735 = vmatpush2.msra.mxu0 0.0
  %736 = vmatprep.subr.mxu0 0.0
  %737 = vmatpush2.msra.mxu0 0.0
  %738 = vmatprep.subr.mxu0 0.0
  %739 = vmatpush2.msra.mxu0 0.0
  %740 = vmatprep.subr.mxu0 0.0
  %741 = vmatpush2.msra.mxu0 0.0
  %742 = vmatprep.subr.mxu0 0.0
  %743 = vmatpush2.msra.mxu0 0.0
  %744 = vmatprep.subr.mxu0 0.0
  %745 = vmatpush2.msra.mxu0 0.0
  %746 = vmatprep.subr.mxu0 0.0
  %747 = vmatpush2.msra.mxu0 0.0
  %748 = vmatprep.subr.mxu0 0.0
  %749 = vmatpush2.msra.mxu0 0.0
  %750 = vmatprep.subr.mxu0 0.0
  %751 = vmatpush2.msra.mxu0 0.0
  %752 = vmatprep.subr.mxu0 0.0
  %753 = vmatpush2.msra.mxu0 0.0
  %754 = vmatprep.subr.mxu0 0.0
  %755 = vmatpush2.msra.mxu0 0.0
  %756 = vmatprep.subr.mxu0 0.0
  %757 = vmatpush2.msra.mxu0 0.0
  %758 = vmatprep.subr.mxu0 0.0
  %759 = vmatpush2.msra.mxu0 0.0
  %760 = vmatprep.mubr.f32.mxu0 0.0
  %v761 = vand.u32 %v681, 4294901760
  %v762 = vsub.f32 %v681, %v761
  %v763 = vand.u32 %v762, 4294901760
  %v764 = vsub.f32 %v762, %v763
  %v765 = vand.u32 %v764, 4294901760
  %766 = vmatmul.mubr.f32.gmra.mxu0 %v765
  %v767 = vpop.f32.mrf.mxu0
  %v768 = vadd.f32 %v662, %v767
  %v769 = vpop.f32.mrf.mxu0
  %770 = vmatprep.mubr.f32.mxu0 0.0
  %v771 = vand.u32 %v684, 4294901760
  %v772 = vsub.f32 %v684, %v771
  %v773 = vand.u32 %v772, 4294901760
  %v774 = vsub.f32 %v772, %v773
  %v775 = vand.u32 %v774, 4294901760
  %776 = vmatmul.mubr.f32.gmra.mxu0 %v775
  %v777 = vpop.f32.mrf.mxu0
  %v778 = vadd.f32 %v667, %v777
  %v779 = vpop.f32.mrf.mxu0
  %780 = vmatprep.mubr.f32.mxu0 0.0
  %v781 = vand.u32 %v687, 4294901760
  %v782 = vsub.f32 %v687, %v781
  %v783 = vand.u32 %v782, 4294901760
  %v784 = vsub.f32 %v782, %v783
  %v785 = vand.u32 %v784, 4294901760
  %786 = vmatmul.mubr.f32.gmra.mxu0 %v785
  %v787 = vpop.f32.mrf.mxu0
  %v788 = vadd.f32 %v672, %v787
  %v789 = vpop.f32.mrf.mxu0
  %790 = vmatprep.mubr.f32.mxu0 0.0
  %v791 = vand.u32 %v690, 4294901760
  %v792 = vsub.f32 %v690, %v791
  %v793 = vand.u32 %v792, 4294901760
  %v794 = vsub.f32 %v792, %v793
  %v795 = vand.u32 %v794, 4294901760
  %796 = vmatmul.mubr.f32.gmra.mxu0 %v795
  %v797 = vpop.f32.mrf.mxu0
  %v798 = vadd.f32 %v677, %v797
  %v799 = vpop.f32.mrf.mxu0
  %800 = vdwg.mxu0
  %801 = vmatprep.subr.mxu0 0.0
  %802 = vmatpush1.msra.mxu0 0.0
  %803 = vmatprep.subr.mxu0 0.0
  %804 = vmatpush1.msra.mxu0 0.0
  %805 = vmatprep.subr.mxu0 0.0
  %806 = vmatpush1.msra.mxu0 0.0
  %807 = vmatprep.subr.mxu0 0.0
  %808 = vmatpush1.msra.mxu0 0.0
  %809 = vmatprep.subr.mxu0 0.0
  %810 = vmatpush1.msra.mxu0 0.0
  %811 = vmatprep.subr.mxu0 0.0
  %812 = vmatpush1.msra.mxu0 0.0
  %813 = vmatprep.subr.mxu0 0.0
  %814 = vmatpush1.msra.mxu0 0.0
  %815 = vmatprep.subr.mxu0 0.0
  %816 = vmatpush1.msra.mxu0 0.0
  %817 = vmatprep.subr.mxu0 0.0
  %818 = vmatpush1.msra.mxu0 0.0
  %819 = vmatprep.subr.mxu0 0.0
  %820 = vmatpush1.msra.mxu0 0.0
  %821 = vmatprep.subr.mxu0 0.0
  %822 = vmatpush1.msra.mxu0 0.0
  %823 = vmatprep.subr.mxu0 0.0
  %824 = vmatpush1.msra.mxu0 0.0
  %825 = vmatprep.subr.mxu0 0.0
  %v826 = vand.u32 %v650, 4294901760
  %v827 = vsub.f32 %v650, %v826
  %v828 = vand.u32 %v827, 4294901760
  %v829 = vsub.f32 %v827, %v828
  %v830 = vand.u32 %v829, 4294901760
  %831 = vmatpush1.msra.mxu0 %v830
  %832 = vmatprep.subr.mxu0 0.0
  %v833 = vand.u32 %v649, 4294901760
  %v834 = vsub.f32 %v649, %v833
  %v835 = vand.u32 %v834, 4294901760
  %v836 = vsub.f32 %v834, %v835
  %v837 = vand.u32 %v836, 4294901760
  %838 = vmatpush1.msra.mxu0 %v837
  %839 = vmatprep.subr.mxu0 0.0
  %v840 = vand.u32 %v648, 4294901760
  %v841 = vsub.f32 %v648, %v840
  %v842 = vand.u32 %v841, 4294901760
  %v843 = vsub.f32 %v841, %v842
  %v844 = vand.u32 %v843, 4294901760
  %845 = vmatpush1.msra.mxu0 %v844
  %846 = vmatprep.subr.mxu0 0.0
  %v847 = vand.u32 %v647, 4294901760
  %v848 = vsub.f32 %v647, %v847
  %v849 = vand.u32 %v848, 4294901760
  %v850 = vsub.f32 %v848, %v849
  %v851 = vand.u32 %v850, 4294901760
  %852 = vmatpush1.msra.mxu0 %v851
  %853 = vmatprep.subr.mxu0 0.0
  %854 = vmatpush2.msra.mxu0 0.0
  %855 = vmatprep.subr.mxu0 0.0
  %856 = vmatpush2.msra.mxu0 0.0
  %857 = vmatprep.subr.mxu0 0.0
  %858 = vmatpush2.msra.mxu0 0.0
  %859 = vmatprep.subr.mxu0 0.0
  %860 = vmatpush2.msra.mxu0 0.0
  %861 = vmatprep.subr.mxu0 0.0
  %862 = vmatpush2.msra.mxu0 0.0
  %863 = vmatprep.subr.mxu0 0.0
  %864 = vmatpush2.msra.mxu0 0.0
  %865 = vmatprep.subr.mxu0 0.0
  %866 = vmatpush2.msra.mxu0 0.0
  %867 = vmatprep.subr.mxu0 0.0
  %868 = vmatpush2.msra.mxu0 0.0
  %869 = vmatprep.subr.mxu0 0.0
  %870 = vmatpush2.msra.mxu0 0.0
  %871 = vmatprep.subr.mxu0 0.0
  %872 = vmatpush2.msra.mxu0 0.0
  %873 = vmatprep.subr.mxu0 0.0
  %874 = vmatpush2.msra.mxu0 0.0
  %875 = vmatprep.subr.mxu0 0.0
  %876 = vmatpush2.msra.mxu0 0.0
  %877 = vmatprep.subr.mxu0 0.0
  %878 = vmatpush2.msra.mxu0 0.0
  %879 = vmatprep.subr.mxu0 0.0
  %880 = vmatpush2.msra.mxu0 0.0
  %881 = vmatprep.subr.mxu0 0.0
  %882 = vmatpush2.msra.mxu0 0.0
  %883 = vmatprep.subr.mxu0 0.0
  %884 = vmatpush2.msra.mxu0 0.0
  %885 = vmatprep.mubr.f32.mxu0 0.0
  %v886 = vand.u32 %v681, 4294901760
  %887 = vmatmul.mubr.f32.gmra.mxu0 %v886
  %v888 = vpop.f32.mrf.mxu0
  %v889 = vadd.f32 %v768, %v888
  %v890 = vpop.f32.mrf.mxu0
  %891 = vmatprep.mubr.f32.mxu0 0.0
  %v892 = vand.u32 %v684, 4294901760
  %893 = vmatmul.mubr.f32.gmra.mxu0 %v892
  %v894 = vpop.f32.mrf.mxu0
  %v895 = vadd.f32 %v778, %v894
  %v896 = vpop.f32.mrf.mxu0
  %897 = vmatprep.mubr.f32.mxu0 0.0
  %v898 = vand.u32 %v687, 4294901760
  %899 = vmatmul.mubr.f32.gmra.mxu0 %v898
  %v900 = vpop.f32.mrf.mxu0
  %v901 = vadd.f32 %v788, %v900
  %v902 = vpop.f32.mrf.mxu0
  %903 = vmatprep.mubr.f32.mxu0 0.0
  %v904 = vand.u32 %v690, 4294901760
  %905 = vmatmul.mubr.f32.gmra.mxu0 %v904
  %v906 = vpop.f32.mrf.mxu0
  %v907 = vadd.f32 %v798, %v906
  %v908 = vpop.f32.mrf.mxu0
  %909 = vdwg.mxu0
  %910 = vmatprep.subr.mxu0 0.0
  %911 = vmatpush1.msra.mxu0 0.0
  %912 = vmatprep.subr.mxu0 0.0
  %913 = vmatpush1.msra.mxu0 0.0
  %914 = vmatprep.subr.mxu0 0.0
  %915 = vmatpush1.msra.mxu0 0.0
  %916 = vmatprep.subr.mxu0 0.0
  %917 = vmatpush1.msra.mxu0 0.0
  %918 = vmatprep.subr.mxu0 0.0
  %919 = vmatpush1.msra.mxu0 0.0
  %920 = vmatprep.subr.mxu0 0.0
  %921 = vmatpush1.msra.mxu0 0.0
  %922 = vmatprep.subr.mxu0 0.0
  %923 = vmatpush1.msra.mxu0 0.0
  %924 = vmatprep.subr.mxu0 0.0
  %925 = vmatpush1.msra.mxu0 0.0
  %926 = vmatprep.subr.mxu0 0.0
  %927 = vmatpush1.msra.mxu0 0.0
  %928 = vmatprep.subr.mxu0 0.0
  %929 = vmatpush1.msra.mxu0 0.0
  %930 = vmatprep.subr.mxu0 0.0
  %931 = vmatpush1.msra.mxu0 0.0
  %932 = vmatprep.subr.mxu0 0.0
  %933 = vmatpush1.msra.mxu0 0.0
  %934 = vmatprep.subr.mxu0 0.0
  %v935 = vand.u32 %v650, 4294901760
  %v936 = vsub.f32 %v650, %v935
  %937 = vmatpush1.msra.mxu0 %v936
  %938 = vmatprep.subr.mxu0 0.0
  %v939 = vand.u32 %v649, 4294901760
  %v940 = vsub.f32 %v649, %v939
  %941 = vmatpush1.msra.mxu0 %v940
  %942 = vmatprep.subr.mxu0 0.0
  %v943 = vand.u32 %v648, 4294901760
  %v944 = vsub.f32 %v648, %v943
  %945 = vmatpush1.msra.mxu0 %v944
  %946 = vmatprep.subr.mxu0 0.0
  %v947 = vand.u32 %v647, 4294901760
  %v948 = vsub.f32 %v647, %v947
  %949 = vmatpush1.msra.mxu0 %v948
  %950 = vmatprep.subr.mxu0 0.0
  %951 = vmatpush2.msra.mxu0 0.0
  %952 = vmatprep.subr.mxu0 0.0
  %953 = vmatpush2.msra.mxu0 0.0
  %954 = vmatprep.subr.mxu0 0.0
  %955 = vmatpush2.msra.mxu0 0.0
  %956 = vmatprep.subr.mxu0 0.0
  %957 = vmatpush2.msra.mxu0 0.0
  %958 = vmatprep.subr.mxu0 0.0
  %959 = vmatpush2.msra.mxu0 0.0
  %960 = vmatprep.subr.mxu0 0.0
  %961 = vmatpush2.msra.mxu0 0.0
  %962 = vmatprep.subr.mxu0 0.0
  %963 = vmatpush2.msra.mxu0 0.0
  %964 = vmatprep.subr.mxu0 0.0
  %965 = vmatpush2.msra.mxu0 0.0
  %966 = vmatprep.subr.mxu0 0.0
  %967 = vmatpush2.msra.mxu0 0.0
  %968 = vmatprep.subr.mxu0 0.0
  %969 = vmatpush2.msra.mxu0 0.0
  %970 = vmatprep.subr.mxu0 0.0
  %971 = vmatpush2.msra.mxu0 0.0
  %972 = vmatprep.subr.mxu0 0.0
  %973 = vmatpush2.msra.mxu0 0.0
  %974 = vmatprep.subr.mxu0 0.0
  %975 = vmatpush2.msra.mxu0 0.0
  %976 = vmatprep.subr.mxu0 0.0
  %977 = vmatpush2.msra.mxu0 0.0
  %978 = vmatprep.subr.mxu0 0.0
  %979 = vmatpush2.msra.mxu0 0.0
  %980 = vmatprep.subr.mxu0 0.0
  %981 = vmatpush2.msra.mxu0 0.0
  %982 = vmatprep.mubr.f32.mxu0 0.0
  %v983 = vand.u32 %v681, 4294901760
  %v984 = vsub.f32 %v681, %v983
  %985 = vmatmul.mubr.f32.gmra.mxu0 %v984
  %v986 = vpop.f32.mrf.mxu0
  %v987 = vadd.f32 %v889, %v986
  %v988 = vpop.f32.mrf.mxu0
  %989 = vmatprep.mubr.f32.mxu0 0.0
  %v990 = vand.u32 %v684, 4294901760
  %v991 = vsub.f32 %v684, %v990
  %992 = vmatmul.mubr.f32.gmra.mxu0 %v991
  %v993 = vpop.f32.mrf.mxu0
  %v994 = vadd.f32 %v895, %v993
  %v995 = vpop.f32.mrf.mxu0
  %996 = vmatprep.mubr.f32.mxu0 0.0
  %v997 = vand.u32 %v687, 4294901760
  %v998 = vsub.f32 %v687, %v997
  %999 = vmatmul.mubr.f32.gmra.mxu0 %v998
  %v1000 = vpop.f32.mrf.mxu0
  %v1001 = vadd.f32 %v901, %v1000
  %v1002 = vpop.f32.mrf.mxu0
  %1003 = vmatprep.mubr.f32.mxu0 0.0
  %v1004 = vand.u32 %v690, 4294901760
  %v1005 = vsub.f32 %v690, %v1004
  %1006 = vmatmul.mubr.f32.gmra.mxu0 %v1005
  %v1007 = vpop.f32.mrf.mxu0
  %v1008 = vadd.f32 %v907, %v1007
  %v1009 = vpop.f32.mrf.mxu0
  %1010 = vdwg.mxu0
  %1011 = vmatprep.subr.mxu0 0.0
  %1012 = vmatpush1.msra.mxu0 0.0
  %1013 = vmatprep.subr.mxu0 0.0
  %1014 = vmatpush1.msra.mxu0 0.0
  %1015 = vmatprep.subr.mxu0 0.0
  %1016 = vmatpush1.msra.mxu0 0.0
  %1017 = vmatprep.subr.mxu0 0.0
  %1018 = vmatpush1.msra.mxu0 0.0
  %1019 = vmatprep.subr.mxu0 0.0
  %1020 = vmatpush1.msra.mxu0 0.0
  %1021 = vmatprep.subr.mxu0 0.0
  %1022 = vmatpush1.msra.mxu0 0.0
  %1023 = vmatprep.subr.mxu0 0.0
  %1024 = vmatpush1.msra.mxu0 0.0
  %1025 = vmatprep.subr.mxu0 0.0
  %1026 = vmatpush1.msra.mxu0 0.0
  %1027 = vmatprep.subr.mxu0 0.0
  %1028 = vmatpush1.msra.mxu0 0.0
  %1029 = vmatprep.subr.mxu0 0.0
  %1030 = vmatpush1.msra.mxu0 0.0
  %1031 = vmatprep.subr.mxu0 0.0
  %1032 = vmatpush1.msra.mxu0 0.0
  %1033 = vmatprep.subr.mxu0 0.0
  %1034 = vmatpush1.msra.mxu0 0.0
  %1035 = vmatprep.subr.mxu0 0.0
  %v1036 = vand.u32 %v650, 4294901760
  %1037 = vmatpush1.msra.mxu0 %v1036
  %1038 = vmatprep.subr.mxu0 0.0
  %v1039 = vand.u32 %v649, 4294901760
  %1040 = vmatpush1.msra.mxu0 %v1039
  %1041 = vmatprep.subr.mxu0 0.0
  %v1042 = vand.u32 %v648, 4294901760
  %1043 = vmatpush1.msra.mxu0 %v1042
  %1044 = vmatprep.subr.mxu0 0.0
  %v1045 = vand.u32 %v647, 4294901760
  %1046 = vmatpush1.msra.mxu0 %v1045
  %1047 = vmatprep.subr.mxu0 0.0
  %1048 = vmatpush2.msra.mxu0 0.0
  %1049 = vmatprep.subr.mxu0 0.0
  %1050 = vmatpush2.msra.mxu0 0.0
  %1051 = vmatprep.subr.mxu0 0.0
  %1052 = vmatpush2.msra.mxu0 0.0
  %1053 = vmatprep.subr.mxu0 0.0
  %1054 = vmatpush2.msra.mxu0 0.0
  %1055 = vmatprep.subr.mxu0 0.0
  %1056 = vmatpush2.msra.mxu0 0.0
  %1057 = vmatprep.subr.mxu0 0.0
  %1058 = vmatpush2.msra.mxu0 0.0
  %1059 = vmatprep.subr.mxu0 0.0
  %1060 = vmatpush2.msra.mxu0 0.0
  %1061 = vmatprep.subr.mxu0 0.0
  %1062 = vmatpush2.msra.mxu0 0.0
  %1063 = vmatprep.subr.mxu0 0.0
  %1064 = vmatpush2.msra.mxu0 0.0
  %1065 = vmatprep.subr.mxu0 0.0
  %1066 = vmatpush2.msra.mxu0 0.0
  %1067 = vmatprep.subr.mxu0 0.0
  %1068 = vmatpush2.msra.mxu0 0.0
  %1069 = vmatprep.subr.mxu0 0.0
  %1070 = vmatpush2.msra.mxu0 0.0
  %1071 = vmatprep.subr.mxu0 0.0
  %1072 = vmatpush2.msra.mxu0 0.0
  %1073 = vmatprep.subr.mxu0 0.0
  %1074 = vmatpush2.msra.mxu0 0.0
  %1075 = vmatprep.subr.mxu0 0.0
  %1076 = vmatpush2.msra.mxu0 0.0
  %1077 = vmatprep.subr.mxu0 0.0
  %1078 = vmatpush2.msra.mxu0 0.0
  %1079 = vmatprep.mubr.f32.mxu0 0.0
  %v1080 = vand.u32 %v681, 4294901760
  %v1081 = vsub.f32 %v681, %v1080
  %v1082 = vand.u32 %v1081, 4294901760
  %1083 = vmatmul.mubr.f32.gmra.mxu0 %v1082
  %v1084 = vpop.f32.mrf.mxu0
  %v1085 = vadd.f32 %v987, %v1084
  %v1086 = vpop.f32.mrf.mxu0
  %1087 = vmatprep.mubr.f32.mxu0 0.0
  %v1088 = vand.u32 %v684, 4294901760
  %v1089 = vsub.f32 %v684, %v1088
  %v1090 = vand.u32 %v1089, 4294901760
  %1091 = vmatmul.mubr.f32.gmra.mxu0 %v1090
  %v1092 = vpop.f32.mrf.mxu0
  %v1093 = vadd.f32 %v994, %v1092
  %v1094 = vpop.f32.mrf.mxu0
  %1095 = vmatprep.mubr.f32.mxu0 0.0
  %v1096 = vand.u32 %v687, 4294901760
  %v1097 = vsub.f32 %v687, %v1096
  %v1098 = vand.u32 %v1097, 4294901760
  %1099 = vmatmul.mubr.f32.gmra.mxu0 %v1098
  %v1100 = vpop.f32.mrf.mxu0
  %v1101 = vadd.f32 %v1001, %v1100
  %v1102 = vpop.f32.mrf.mxu0
  %1103 = vmatprep.mubr.f32.mxu0 0.0
  %v1104 = vand.u32 %v690, 4294901760
  %v1105 = vsub.f32 %v690, %v1104
  %v1106 = vand.u32 %v1105, 4294901760
  %1107 = vmatmul.mubr.f32.gmra.mxu0 %v1106
  %v1108 = vpop.f32.mrf.mxu0
  %v1109 = vadd.f32 %v1008, %v1108
  %v1110 = vpop.f32.mrf.mxu0
  %1111 = vdwg.mxu0
  %1112 = vmatprep.subr.mxu0 0.0
  %1113 = vmatpush1.msra.mxu0 0.0
  %1114 = vmatprep.subr.mxu0 0.0
  %1115 = vmatpush1.msra.mxu0 0.0
  %1116 = vmatprep.subr.mxu0 0.0
  %1117 = vmatpush1.msra.mxu0 0.0
  %1118 = vmatprep.subr.mxu0 0.0
  %1119 = vmatpush1.msra.mxu0 0.0
  %1120 = vmatprep.subr.mxu0 0.0
  %1121 = vmatpush1.msra.mxu0 0.0
  %1122 = vmatprep.subr.mxu0 0.0
  %1123 = vmatpush1.msra.mxu0 0.0
  %1124 = vmatprep.subr.mxu0 0.0
  %1125 = vmatpush1.msra.mxu0 0.0
  %1126 = vmatprep.subr.mxu0 0.0
  %1127 = vmatpush1.msra.mxu0 0.0
  %1128 = vmatprep.subr.mxu0 0.0
  %1129 = vmatpush1.msra.mxu0 0.0
  %1130 = vmatprep.subr.mxu0 0.0
  %1131 = vmatpush1.msra.mxu0 0.0
  %1132 = vmatprep.subr.mxu0 0.0
  %1133 = vmatpush1.msra.mxu0 0.0
  %1134 = vmatprep.subr.mxu0 0.0
  %1135 = vmatpush1.msra.mxu0 0.0
  %1136 = vmatprep.subr.mxu0 0.0
  %v1137 = vand.u32 %v650, 4294901760
  %v1138 = vsub.f32 %v650, %v1137
  %v1139 = vand.u32 %v1138, 4294901760
  %1140 = vmatpush1.msra.mxu0 %v1139
  %1141 = vmatprep.subr.mxu0 0.0
  %v1142 = vand.u32 %v649, 4294901760
  %v1143 = vsub.f32 %v649, %v1142
  %v1144 = vand.u32 %v1143, 4294901760
  %1145 = vmatpush1.msra.mxu0 %v1144
  %1146 = vmatprep.subr.mxu0 0.0
  %v1147 = vand.u32 %v648, 4294901760
  %v1148 = vsub.f32 %v648, %v1147
  %v1149 = vand.u32 %v1148, 4294901760
  %1150 = vmatpush1.msra.mxu0 %v1149
  %1151 = vmatprep.subr.mxu0 0.0
  %v1152 = vand.u32 %v647, 4294901760
  %v1153 = vsub.f32 %v647, %v1152
  %v1154 = vand.u32 %v1153, 4294901760
  %1155 = vmatpush1.msra.mxu0 %v1154
  %1156 = vmatprep.subr.mxu0 0.0
  %1157 = vmatpush2.msra.mxu0 0.0
  %1158 = vmatprep.subr.mxu0 0.0
  %1159 = vmatpush2.msra.mxu0 0.0
  %1160 = vmatprep.subr.mxu0 0.0
  %1161 = vmatpush2.msra.mxu0 0.0
  %1162 = vmatprep.subr.mxu0 0.0
  %1163 = vmatpush2.msra.mxu0 0.0
  %1164 = vmatprep.subr.mxu0 0.0
  %1165 = vmatpush2.msra.mxu0 0.0
  %1166 = vmatprep.subr.mxu0 0.0
  %1167 = vmatpush2.msra.mxu0 0.0
  %1168 = vmatprep.subr.mxu0 0.0
  %1169 = vmatpush2.msra.mxu0 0.0
  %1170 = vmatprep.subr.mxu0 0.0
  %1171 = vmatpush2.msra.mxu0 0.0
  %1172 = vmatprep.subr.mxu0 0.0
  %1173 = vmatpush2.msra.mxu0 0.0
  %1174 = vmatprep.subr.mxu0 0.0
  %1175 = vmatpush2.msra.mxu0 0.0
  %1176 = vmatprep.subr.mxu0 0.0
  %1177 = vmatpush2.msra.mxu0 0.0
  %1178 = vmatprep.subr.mxu0 0.0
  %1179 = vmatpush2.msra.mxu0 0.0
  %1180 = vmatprep.subr.mxu0 0.0
  %1181 = vmatpush2.msra.mxu0 0.0
  %1182 = vmatprep.subr.mxu0 0.0
  %1183 = vmatpush2.msra.mxu0 0.0
  %1184 = vmatprep.subr.mxu0 0.0
  %1185 = vmatpush2.msra.mxu0 0.0
  %1186 = vmatprep.subr.mxu0 0.0
  %1187 = vmatpush2.msra.mxu0 0.0
  %1188 = vmatprep.mubr.f32.mxu0 0.0
  %v1189 = vand.u32 %v681, 4294901760
  %1190 = vmatmul.mubr.f32.gmra.mxu0 %v1189
  %v1191 = vpop.f32.mrf.mxu0
  %v1192 = vadd.f32 %v1085, %v1191
  %v1193 = vpop.f32.mrf.mxu0
  %1194 = vmatprep.mubr.f32.mxu0 0.0
  %v1195 = vand.u32 %v684, 4294901760
  %1196 = vmatmul.mubr.f32.gmra.mxu0 %v1195
  %v1197 = vpop.f32.mrf.mxu0
  %v1198 = vadd.f32 %v1093, %v1197
  %v1199 = vpop.f32.mrf.mxu0
  %1200 = vmatprep.mubr.f32.mxu0 0.0
  %v1201 = vand.u32 %v687, 4294901760
  %1202 = vmatmul.mubr.f32.gmra.mxu0 %v1201
  %v1203 = vpop.f32.mrf.mxu0
  %v1204 = vadd.f32 %v1101, %v1203
  %v1205 = vpop.f32.mrf.mxu0
  %1206 = vmatprep.mubr.f32.mxu0 0.0
  %v1207 = vand.u32 %v690, 4294901760
  %1208 = vmatmul.mubr.f32.gmra.mxu0 %v1207
  %v1209 = vpop.f32.mrf.mxu0
  %v1210 = vadd.f32 %v1109, %v1209
  %v1211 = vpop.f32.mrf.mxu0
  %1212 = vdwg.mxu0
  %1213 = vmatprep.subr.mxu0 0.0
  %1214 = vmatpush1.msra.mxu0 0.0
  %1215 = vmatprep.subr.mxu0 0.0
  %1216 = vmatpush1.msra.mxu0 0.0
  %1217 = vmatprep.subr.mxu0 0.0
  %1218 = vmatpush1.msra.mxu0 0.0
  %1219 = vmatprep.subr.mxu0 0.0
  %1220 = vmatpush1.msra.mxu0 0.0
  %1221 = vmatprep.subr.mxu0 0.0
  %1222 = vmatpush1.msra.mxu0 0.0
  %1223 = vmatprep.subr.mxu0 0.0
  %1224 = vmatpush1.msra.mxu0 0.0
  %1225 = vmatprep.subr.mxu0 0.0
  %1226 = vmatpush1.msra.mxu0 0.0
  %1227 = vmatprep.subr.mxu0 0.0
  %1228 = vmatpush1.msra.mxu0 0.0
  %1229 = vmatprep.subr.mxu0 0.0
  %1230 = vmatpush1.msra.mxu0 0.0
  %1231 = vmatprep.subr.mxu0 0.0
  %1232 = vmatpush1.msra.mxu0 0.0
  %1233 = vmatprep.subr.mxu0 0.0
  %1234 = vmatpush1.msra.mxu0 0.0
  %1235 = vmatprep.subr.mxu0 0.0
  %1236 = vmatpush1.msra.mxu0 0.0
  %1237 = vmatprep.subr.mxu0 0.0
  %v1238 = vand.u32 %v650, 4294901760
  %1239 = vmatpush1.msra.mxu0 %v1238
  %1240 = vmatprep.subr.mxu0 0.0
  %v1241 = vand.u32 %v649, 4294901760
  %1242 = vmatpush1.msra.mxu0 %v1241
  %1243 = vmatprep.subr.mxu0 0.0
  %v1244 = vand.u32 %v648, 4294901760
  %1245 = vmatpush1.msra.mxu0 %v1244
  %1246 = vmatprep.subr.mxu0 0.0
  %v1247 = vand.u32 %v647, 4294901760
  %1248 = vmatpush1.msra.mxu0 %v1247
  %1249 = vmatprep.subr.mxu0 0.0
  %1250 = vmatpush2.msra.mxu0 0.0
  %1251 = vmatprep.subr.mxu0 0.0
  %1252 = vmatpush2.msra.mxu0 0.0
  %1253 = vmatprep.subr.mxu0 0.0
  %1254 = vmatpush2.msra.mxu0 0.0
  %1255 = vmatprep.subr.mxu0 0.0
  %1256 = vmatpush2.msra.mxu0 0.0
  %1257 = vmatprep.subr.mxu0 0.0
  %1258 = vmatpush2.msra.mxu0 0.0
  %1259 = vmatprep.subr.mxu0 0.0
  %1260 = vmatpush2.msra.mxu0 0.0
  %1261 = vmatprep.subr.mxu0 0.0
  %1262 = vmatpush2.msra.mxu0 0.0
  %1263 = vmatprep.subr.mxu0 0.0
  %1264 = vmatpush2.msra.mxu0 0.0
  %1265 = vmatprep.subr.mxu0 0.0
  %1266 = vmatpush2.msra.mxu0 0.0
  %1267 = vmatprep.subr.mxu0 0.0
  %1268 = vmatpush2.msra.mxu0 0.0
  %1269 = vmatprep.subr.mxu0 0.0
  %1270 = vmatpush2.msra.mxu0 0.0
  %1271 = vmatprep.subr.mxu0 0.0
  %1272 = vmatpush2.msra.mxu0 0.0
  %1273 = vmatprep.subr.mxu0 0.0
  %1274 = vmatpush2.msra.mxu0 0.0
  %1275 = vmatprep.subr.mxu0 0.0
  %1276 = vmatpush2.msra.mxu0 0.0
  %1277 = vmatprep.subr.mxu0 0.0
  %1278 = vmatpush2.msra.mxu0 0.0
  %1279 = vmatprep.subr.mxu0 0.0
  %1280 = vmatpush2.msra.mxu0 0.0
  %1281 = vmatprep.mubr.f32.mxu0 0.0
  %v1282 = vand.u32 %v681, 4294901760
  %1283 = vmatmul.mubr.f32.gmra.mxu0 %v1282
  %v1284 = vpop.f32.mrf.mxu0
  %v1285 = vadd.f32 %v1192, %v1284
  %v1286 = vpop.f32.mrf.mxu0
  %1287 = vmatprep.mubr.f32.mxu0 0.0
  %v1288 = vand.u32 %v684, 4294901760
  %1289 = vmatmul.mubr.f32.gmra.mxu0 %v1288
  %v1290 = vpop.f32.mrf.mxu0
  %v1291 = vadd.f32 %v1198, %v1290
  %v1292 = vpop.f32.mrf.mxu0
  %1293 = vmatprep.mubr.f32.mxu0 0.0
  %v1294 = vand.u32 %v687, 4294901760
  %1295 = vmatmul.mubr.f32.gmra.mxu0 %v1294
  %v1296 = vpop.f32.mrf.mxu0
  %v1297 = vadd.f32 %v1204, %v1296
  %v1298 = vpop.f32.mrf.mxu0
  %1299 = vmatprep.mubr.f32.mxu0 0.0
  %v1300 = vand.u32 %v690, 4294901760
  %1301 = vmatmul.mubr.f32.gmra.mxu0 %v1300
  %v1302 = vpop.f32.mrf.mxu0
  %v1303 = vadd.f32 %v1210, %v1302
  %v1304 = vpop.f32.mrf.mxu0
  %1305 = vdwg.mxu0
  %v1306 = vmax.f32 %v1285, 0.0
  %v1307 = vmax.f32 %v1291, 0.0
  %v1308 = vmax.f32 %v1297, 0.0
  %v1309 = vmax.f32 %v1303, 0.0
  %v1310 = vld [vmem:[%s5] sm:$0x3]
  %v1311 = vld [vmem:[%s6] sm:$0x3]
  %1313 = vset.pattern.permute.xlu0 0
  %1314 = vperm.xlu0 %1313, %v1311
  %v1315 = vpop.permute.xlu0 %1314
  %v1318 = vsel %vm679, %v1310, 0
  %1320 = vmatprep.subr.mxu0 0.0
  %1321 = vmatpush1.msra.mxu0 0.0
  %1322 = vmatprep.subr.mxu0 0.0
  %1323 = vmatpush1.msra.mxu0 0.0
  %1324 = vmatprep.subr.mxu0 0.0
  %1325 = vmatpush1.msra.mxu0 0.0
  %1326 = vmatprep.subr.mxu0 0.0
  %1327 = vmatpush1.msra.mxu0 0.0
  %1328 = vmatprep.subr.mxu0 0.0
  %1329 = vmatpush1.msra.mxu0 0.0
  %1330 = vmatprep.subr.mxu0 0.0
  %1331 = vmatpush1.msra.mxu0 0.0
  %1332 = vmatprep.subr.mxu0 0.0
  %1333 = vmatpush1.msra.mxu0 0.0
  %1334 = vmatprep.subr.mxu0 0.0
  %1335 = vmatpush1.msra.mxu0 0.0
  %1336 = vmatprep.subr.mxu0 0.0
  %1337 = vmatpush1.msra.mxu0 0.0
  %1338 = vmatprep.subr.mxu0 0.0
  %1339 = vmatpush1.msra.mxu0 0.0
  %1340 = vmatprep.subr.mxu0 0.0
  %1341 = vmatpush1.msra.mxu0 0.0
  %1342 = vmatprep.subr.mxu0 0.0
  %1343 = vmatpush1.msra.mxu0 0.0
  %1344 = vmatprep.subr.mxu0 0.0
  %v1345 = vand.u32 %v1309, 4294901760
  %1346 = vmatpush1.msra.mxu0 %v1345
  %1347 = vmatprep.subr.mxu0 0.0
  %v1348 = vand.u32 %v1308, 4294901760
  %1349 = vmatpush1.msra.mxu0 %v1348
  %1350 = vmatprep.subr.mxu0 0.0
  %v1351 = vand.u32 %v1307, 4294901760
  %1352 = vmatpush1.msra.mxu0 %v1351
  %1353 = vmatprep.subr.mxu0 0.0
  %v1354 = vand.u32 %v1306, 4294901760
  %1355 = vmatpush1.msra.mxu0 %v1354
  %1356 = vmatprep.subr.mxu0 0.0
  %1357 = vmatpush2.msra.mxu0 0.0
  %1358 = vmatprep.subr.mxu0 0.0
  %1359 = vmatpush2.msra.mxu0 0.0
  %1360 = vmatprep.subr.mxu0 0.0
  %1361 = vmatpush2.msra.mxu0 0.0
  %1362 = vmatprep.subr.mxu0 0.0
  %1363 = vmatpush2.msra.mxu0 0.0
  %1364 = vmatprep.subr.mxu0 0.0
  %1365 = vmatpush2.msra.mxu0 0.0
  %1366 = vmatprep.subr.mxu0 0.0
  %1367 = vmatpush2.msra.mxu0 0.0
  %1368 = vmatprep.subr.mxu0 0.0
  %1369 = vmatpush2.msra.mxu0 0.0
  %1370 = vmatprep.subr.mxu0 0.0
  %1371 = vmatpush2.msra.mxu0 0.0
  %1372 = vmatprep.subr.mxu0 0.0
  %1373 = vmatpush2.msra.mxu0 0.0
  %1374 = vmatprep.subr.mxu0 0.0
  %1375 = vmatpush2.msra.mxu0 0.0
  %1376 = vmatprep.subr.mxu0 0.0
  %1377 = vmatpush2.msra.mxu0 0.0
  %1378 = vmatprep.subr.mxu0 0.0
  %1379 = vmatpush2.msra.mxu0 0.0
  %1380 = vmatprep.subr.mxu0 0.0
  %1381 = vmatpush2.msra.mxu0 0.0
  %1382 = vmatprep.subr.mxu0 0.0
  %1383 = vmatpush2.msra.mxu0 0.0
  %1384 = vmatprep.subr.mxu0 0.0
  %1385 = vmatpush2.msra.mxu0 0.0
  %1386 = vmatprep.subr.mxu0 0.0
  %1387 = vmatpush2.msra.mxu0 0.0
  %1388 = vmatprep.mubr.f32.mxu0 0.0
  %v1389 = vand.u32 %v1318, 4294901760
  %v1390 = vsub.f32 %v1318, %v1389
  %v1391 = vand.u32 %v1390, 4294901760
  %v1392 = vsub.f32 %v1390, %v1391
  %v1393 = vand.u32 %v1392, 4294901760
  %1394 = vmatmul.mubr.f32.gmra.mxu0 %v1393
  %v1395 = vpop.f32.mrf.mxu0
  %v1396 = vadd.f32 %v1315, %v1395
  %v1397 = vpop.f32.mrf.mxu0
  %1398 = vdwg.mxu0
  %1399 = vmatprep.subr.mxu0 0.0
  %1400 = vmatpush1.msra.mxu0 0.0
  %1401 = vmatprep.subr.mxu0 0.0
  %1402 = vmatpush1.msra.mxu0 0.0
  %1403 = vmatprep.subr.mxu0 0.0
  %1404 = vmatpush1.msra.mxu0 0.0
  %1405 = vmatprep.subr.mxu0 0.0
  %1406 = vmatpush1.msra.mxu0 0.0
  %1407 = vmatprep.subr.mxu0 0.0
  %1408 = vmatpush1.msra.mxu0 0.0
  %1409 = vmatprep.subr.mxu0 0.0
  %1410 = vmatpush1.msra.mxu0 0.0
  %1411 = vmatprep.subr.mxu0 0.0
  %1412 = vmatpush1.msra.mxu0 0.0
  %1413 = vmatprep.subr.mxu0 0.0
  %1414 = vmatpush1.msra.mxu0 0.0
  %1415 = vmatprep.subr.mxu0 0.0
  %1416 = vmatpush1.msra.mxu0 0.0
  %1417 = vmatprep.subr.mxu0 0.0
  %1418 = vmatpush1.msra.mxu0 0.0
  %1419 = vmatprep.subr.mxu0 0.0
  %1420 = vmatpush1.msra.mxu0 0.0
  %1421 = vmatprep.subr.mxu0 0.0
  %1422 = vmatpush1.msra.mxu0 0.0
  %1423 = vmatprep.subr.mxu0 0.0
  %v1424 = vand.u32 %v1309, 4294901760
  %v1425 = vsub.f32 %v1309, %v1424
  %v1426 = vand.u32 %v1425, 4294901760
  %v1427 = vsub.f32 %v1425, %v1426
  %v1428 = vand.u32 %v1427, 4294901760
  %1429 = vmatpush1.msra.mxu0 %v1428
  %1430 = vmatprep.subr.mxu0 0.0
  %v1431 = vand.u32 %v1308, 4294901760
  %v1432 = vsub.f32 %v1308, %v1431
  %v1433 = vand.u32 %v1432, 4294901760
  %v1434 = vsub.f32 %v1432, %v1433
  %v1435 = vand.u32 %v1434, 4294901760
  %1436 = vmatpush1.msra.mxu0 %v1435
  %1437 = vmatprep.subr.mxu0 0.0
  %v1438 = vand.u32 %v1307, 4294901760
  %v1439 = vsub.f32 %v1307, %v1438
  %v1440 = vand.u32 %v1439, 4294901760
  %v1441 = vsub.f32 %v1439, %v1440
  %v1442 = vand.u32 %v1441, 4294901760
  %1443 = vmatpush1.msra.mxu0 %v1442
  %1444 = vmatprep.subr.mxu0 0.0
  %v1445 = vand.u32 %v1306, 4294901760
  %v1446 = vsub.f32 %v1306, %v1445
  %v1447 = vand.u32 %v1446, 4294901760
  %v1448 = vsub.f32 %v1446, %v1447
  %v1449 = vand.u32 %v1448, 4294901760
  %1450 = vmatpush1.msra.mxu0 %v1449
  %1451 = vmatprep.subr.mxu0 0.0
  %1452 = vmatpush2.msra.mxu0 0.0
  %1453 = vmatprep.subr.mxu0 0.0
  %1454 = vmatpush2.msra.mxu0 0.0
  %1455 = vmatprep.subr.mxu0 0.0
  %1456 = vmatpush2.msra.mxu0 0.0
  %1457 = vmatprep.subr.mxu0 0.0
  %1458 = vmatpush2.msra.mxu0 0.0
  %1459 = vmatprep.subr.mxu0 0.0
  %1460 = vmatpush2.msra.mxu0 0.0
  %1461 = vmatprep.subr.mxu0 0.0
  %1462 = vmatpush2.msra.mxu0 0.0
  %1463 = vmatprep.subr.mxu0 0.0
  %1464 = vmatpush2.msra.mxu0 0.0
  %1465 = vmatprep.subr.mxu0 0.0
  %1466 = vmatpush2.msra.mxu0 0.0
  %1467 = vmatprep.subr.mxu0 0.0
  %1468 = vmatpush2.msra.mxu0 0.0
  %1469 = vmatprep.subr.mxu0 0.0
  %1470 = vmatpush2.msra.mxu0 0.0
  %1471 = vmatprep.subr.mxu0 0.0
  %1472 = vmatpush2.msra.mxu0 0.0
  %1473 = vmatprep.subr.mxu0 0.0
  %1474 = vmatpush2.msra.mxu0 0.0
  %1475 = vmatprep.subr.mxu0 0.0
  %1476 = vmatpush2.msra.mxu0 0.0
  %1477 = vmatprep.subr.mxu0 0.0
  %1478 = vmatpush2.msra.mxu0 0.0
  %1479 = vmatprep.subr.mxu0 0.0
  %1480 = vmatpush2.msra.mxu0 0.0
  %1481 = vmatprep.subr.mxu0 0.0
  %1482 = vmatpush2.msra.mxu0 0.0
  %1483 = vmatprep.mubr.f32.mxu0 0.0
  %v1484 = vand.u32 %v1318, 4294901760
  %1485 = vmatmul.mubr.f32.gmra.mxu0 %v1484
  %v1486 = vpop.f32.mrf.mxu0
  %v1487 = vadd.f32 %v1396, %v1486
  %v1488 = vpop.f32.mrf.mxu0
  %1489 = vdwg.mxu0
  %1490 = vmatprep.subr.mxu0 0.0
  %1491 = vmatpush1.msra.mxu0 0.0
  %1492 = vmatprep.subr.mxu0 0.0
  %1493 = vmatpush1.msra.mxu0 0.0
  %1494 = vmatprep.subr.mxu0 0.0
  %1495 = vmatpush1.msra.mxu0 0.0
  %1496 = vmatprep.subr.mxu0 0.0
  %1497 = vmatpush1.msra.mxu0 0.0
  %1498 = vmatprep.subr.mxu0 0.0
  %1499 = vmatpush1.msra.mxu0 0.0
  %1500 = vmatprep.subr.mxu0 0.0
  %1501 = vmatpush1.msra.mxu0 0.0
  %1502 = vmatprep.subr.mxu0 0.0
  %1503 = vmatpush1.msra.mxu0 0.0
  %1504 = vmatprep.subr.mxu0 0.0
  %1505 = vmatpush1.msra.mxu0 0.0
  %1506 = vmatprep.subr.mxu0 0.0
  %1507 = vmatpush1.msra.mxu0 0.0
  %1508 = vmatprep.subr.mxu0 0.0
  %1509 = vmatpush1.msra.mxu0 0.0
  %1510 = vmatprep.subr.mxu0 0.0
  %1511 = vmatpush1.msra.mxu0 0.0
  %1512 = vmatprep.subr.mxu0 0.0
  %1513 = vmatpush1.msra.mxu0 0.0
  %1514 = vmatprep.subr.mxu0 0.0
  %v1515 = vand.u32 %v1309, 4294901760
  %v1516 = vsub.f32 %v1309, %v1515
  %1517 = vmatpush1.msra.mxu0 %v1516
  %1518 = vmatprep.subr.mxu0 0.0
  %v1519 = vand.u32 %v1308, 4294901760
  %v1520 = vsub.f32 %v1308, %v1519
  %1521 = vmatpush1.msra.mxu0 %v1520
  %1522 = vmatprep.subr.mxu0 0.0
  %v1523 = vand.u32 %v1307, 4294901760
  %v1524 = vsub.f32 %v1307, %v1523
  %1525 = vmatpush1.msra.mxu0 %v1524
  %1526 = vmatprep.subr.mxu0 0.0
  %v1527 = vand.u32 %v1306, 4294901760
  %v1528 = vsub.f32 %v1306, %v1527
  %1529 = vmatpush1.msra.mxu0 %v1528
  %1530 = vmatprep.subr.mxu0 0.0
  %1531 = vmatpush2.msra.mxu0 0.0
  %1532 = vmatprep.subr.mxu0 0.0
  %1533 = vmatpush2.msra.mxu0 0.0
  %1534 = vmatprep.subr.mxu0 0.0
  %1535 = vmatpush2.msra.mxu0 0.0
  %1536 = vmatprep.subr.mxu0 0.0
  %1537 = vmatpush2.msra.mxu0 0.0
  %1538 = vmatprep.subr.mxu0 0.0
  %1539 = vmatpush2.msra.mxu0 0.0
  %1540 = vmatprep.subr.mxu0 0.0
  %1541 = vmatpush2.msra.mxu0 0.0
  %1542 = vmatprep.subr.mxu0 0.0
  %1543 = vmatpush2.msra.mxu0 0.0
  %1544 = vmatprep.subr.mxu0 0.0
  %1545 = vmatpush2.msra.mxu0 0.0
  %1546 = vmatprep.subr.mxu0 0.0
  %1547 = vmatpush2.msra.mxu0 0.0
  %1548 = vmatprep.subr.mxu0 0.0
  %1549 = vmatpush2.msra.mxu0 0.0
  %1550 = vmatprep.subr.mxu0 0.0
  %1551 = vmatpush2.msra.mxu0 0.0
  %1552 = vmatprep.subr.mxu0 0.0
  %1553 = vmatpush2.msra.mxu0 0.0
  %1554 = vmatprep.subr.mxu0 0.0
  %1555 = vmatpush2.msra.mxu0 0.0
  %1556 = vmatprep.subr.mxu0 0.0
  %1557 = vmatpush2.msra.mxu0 0.0
  %1558 = vmatprep.subr.mxu0 0.0
  %1559 = vmatpush2.msra.mxu0 0.0
  %1560 = vmatprep.subr.mxu0 0.0
  %1561 = vmatpush2.msra.mxu0 0.0
  %1562 = vmatprep.mubr.f32.mxu0 0.0
  %v1563 = vand.u32 %v1318, 4294901760
  %v1564 = vsub.f32 %v1318, %v1563
  %1565 = vmatmul.mubr.f32.gmra.mxu0 %v1564
  %v1566 = vpop.f32.mrf.mxu0
  %v1567 = vadd.f32 %v1487, %v1566
  %v1568 = vpop.f32.mrf.mxu0
  %1569 = vdwg.mxu0
  %1570 = vmatprep.subr.mxu0 0.0
  %1571 = vmatpush1.msra.mxu0 0.0
  %1572 = vmatprep.subr.mxu0 0.0
  %1573 = vmatpush1.msra.mxu0 0.0
  %1574 = vmatprep.subr.mxu0 0.0
  %1575 = vmatpush1.msra.mxu0 0.0
  %1576 = vmatprep.subr.mxu0 0.0
  %1577 = vmatpush1.msra.mxu0 0.0
  %1578 = vmatprep.subr.mxu0 0.0
  %1579 = vmatpush1.msra.mxu0 0.0
  %1580 = vmatprep.subr.mxu0 0.0
  %1581 = vmatpush1.msra.mxu0 0.0
  %1582 = vmatprep.subr.mxu0 0.0
  %1583 = vmatpush1.msra.mxu0 0.0
  %1584 = vmatprep.subr.mxu0 0.0
  %1585 = vmatpush1.msra.mxu0 0.0
  %1586 = vmatprep.subr.mxu0 0.0
  %1587 = vmatpush1.msra.mxu0 0.0
  %1588 = vmatprep.subr.mxu0 0.0
  %1589 = vmatpush1.msra.mxu0 0.0
  %1590 = vmatprep.subr.mxu0 0.0
  %1591 = vmatpush1.msra.mxu0 0.0
  %1592 = vmatprep.subr.mxu0 0.0
  %1593 = vmatpush1.msra.mxu0 0.0
  %1594 = vmatprep.subr.mxu0 0.0
  %v1595 = vand.u32 %v1309, 4294901760
  %1596 = vmatpush1.msra.mxu0 %v1595
  %1597 = vmatprep.subr.mxu0 0.0
  %v1598 = vand.u32 %v1308, 4294901760
  %1599 = vmatpush1.msra.mxu0 %v1598
  %1600 = vmatprep.subr.mxu0 0.0
  %v1601 = vand.u32 %v1307, 4294901760
  %1602 = vmatpush1.msra.mxu0 %v1601
  %1603 = vmatprep.subr.mxu0 0.0
  %v1604 = vand.u32 %v1306, 4294901760
  %1605 = vmatpush1.msra.mxu0 %v1604
  %1606 = vmatprep.subr.mxu0 0.0
  %1607 = vmatpush2.msra.mxu0 0.0
  %1608 = vmatprep.subr.mxu0 0.0
  %1609 = vmatpush2.msra.mxu0 0.0
  %1610 = vmatprep.subr.mxu0 0.0
  %1611 = vmatpush2.msra.mxu0 0.0
  %1612 = vmatprep.subr.mxu0 0.0
  %1613 = vmatpush2.msra.mxu0 0.0
  %1614 = vmatprep.subr.mxu0 0.0
  %1615 = vmatpush2.msra.mxu0 0.0
  %1616 = vmatprep.subr.mxu0 0.0
  %1617 = vmatpush2.msra.mxu0 0.0
  %1618 = vmatprep.subr.mxu0 0.0
  %1619 = vmatpush2.msra.mxu0 0.0
  %1620 = vmatprep.subr.mxu0 0.0
  %1621 = vmatpush2.msra.mxu0 0.0
  %1622 = vmatprep.subr.mxu0 0.0
  %1623 = vmatpush2.msra.mxu0 0.0
  %1624 = vmatprep.subr.mxu0 0.0
  %1625 = vmatpush2.msra.mxu0 0.0
  %1626 = vmatprep.subr.mxu0 0.0
  %1627 = vmatpush2.msra.mxu0 0.0
  %1628 = vmatprep.subr.mxu0 0.0
  %1629 = vmatpush2.msra.mxu0 0.0
  %1630 = vmatprep.subr.mxu0 0.0
  %1631 = vmatpush2.msra.mxu0 0.0
  %1632 = vmatprep.subr.mxu0 0.0
  %1633 = vmatpush2.msra.mxu0 0.0
  %1634 = vmatprep.subr.mxu0 0.0
  %1635 = vmatpush2.msra.mxu0 0.0
  %1636 = vmatprep.subr.mxu0 0.0
  %1637 = vmatpush2.msra.mxu0 0.0
  %1638 = vmatprep.mubr.f32.mxu0 0.0
  %v1639 = vand.u32 %v1318, 4294901760
  %v1640 = vsub.f32 %v1318, %v1639
  %v1641 = vand.u32 %v1640, 4294901760
  %1642 = vmatmul.mubr.f32.gmra.mxu0 %v1641
  %v1643 = vpop.f32.mrf.mxu0
  %v1644 = vadd.f32 %v1567, %v1643
  %v1645 = vpop.f32.mrf.mxu0
  %1646 = vdwg.mxu0
  %1647 = vmatprep.subr.mxu0 0.0
  %1648 = vmatpush1.msra.mxu0 0.0
  %1649 = vmatprep.subr.mxu0 0.0
  %1650 = vmatpush1.msra.mxu0 0.0
  %1651 = vmatprep.subr.mxu0 0.0
  %1652 = vmatpush1.msra.mxu0 0.0
  %1653 = vmatprep.subr.mxu0 0.0
  %1654 = vmatpush1.msra.mxu0 0.0
  %1655 = vmatprep.subr.mxu0 0.0
  %1656 = vmatpush1.msra.mxu0 0.0
  %1657 = vmatprep.subr.mxu0 0.0
  %1658 = vmatpush1.msra.mxu0 0.0
  %1659 = vmatprep.subr.mxu0 0.0
  %1660 = vmatpush1.msra.mxu0 0.0
  %1661 = vmatprep.subr.mxu0 0.0
  %1662 = vmatpush1.msra.mxu0 0.0
  %1663 = vmatprep.subr.mxu0 0.0
  %1664 = vmatpush1.msra.mxu0 0.0
  %1665 = vmatprep.subr.mxu0 0.0
  %1666 = vmatpush1.msra.mxu0 0.0
  %1667 = vmatprep.subr.mxu0 0.0
  %1668 = vmatpush1.msra.mxu0 0.0
  %1669 = vmatprep.subr.mxu0 0.0
  %1670 = vmatpush1.msra.mxu0 0.0
  %1671 = vmatprep.subr.mxu0 0.0
  %v1672 = vand.u32 %v1309, 4294901760
  %v1673 = vsub.f32 %v1309, %v1672
  %v1674 = vand.u32 %v1673, 4294901760
  %1675 = vmatpush1.msra.mxu0 %v1674
  %1676 = vmatprep.subr.mxu0 0.0
  %v1677 = vand.u32 %v1308, 4294901760
  %v1678 = vsub.f32 %v1308, %v1677
  %v1679 = vand.u32 %v1678, 4294901760
  %1680 = vmatpush1.msra.mxu0 %v1679
  %1681 = vmatprep.subr.mxu0 0.0
  %v1682 = vand.u32 %v1307, 4294901760
  %v1683 = vsub.f32 %v1307, %v1682
  %v1684 = vand.u32 %v1683, 4294901760
  %1685 = vmatpush1.msra.mxu0 %v1684
  %1686 = vmatprep.subr.mxu0 0.0
  %v1687 = vand.u32 %v1306, 4294901760
  %v1688 = vsub.f32 %v1306, %v1687
  %v1689 = vand.u32 %v1688, 4294901760
  %1690 = vmatpush1.msra.mxu0 %v1689
  %1691 = vmatprep.subr.mxu0 0.0
  %1692 = vmatpush2.msra.mxu0 0.0
  %1693 = vmatprep.subr.mxu0 0.0
  %1694 = vmatpush2.msra.mxu0 0.0
  %1695 = vmatprep.subr.mxu0 0.0
  %1696 = vmatpush2.msra.mxu0 0.0
  %1697 = vmatprep.subr.mxu0 0.0
  %1698 = vmatpush2.msra.mxu0 0.0
  %1699 = vmatprep.subr.mxu0 0.0
  %1700 = vmatpush2.msra.mxu0 0.0
  %1701 = vmatprep.subr.mxu0 0.0
  %1702 = vmatpush2.msra.mxu0 0.0
  %1703 = vmatprep.subr.mxu0 0.0
  %1704 = vmatpush2.msra.mxu0 0.0
  %1705 = vmatprep.subr.mxu0 0.0
  %1706 = vmatpush2.msra.mxu0 0.0
  %1707 = vmatprep.subr.mxu0 0.0
  %1708 = vmatpush2.msra.mxu0 0.0
  %1709 = vmatprep.subr.mxu0 0.0
  %1710 = vmatpush2.msra.mxu0 0.0
  %1711 = vmatprep.subr.mxu0 0.0
  %1712 = vmatpush2.msra.mxu0 0.0
  %1713 = vmatprep.subr.mxu0 0.0
  %1714 = vmatpush2.msra.mxu0 0.0
  %1715 = vmatprep.subr.mxu0 0.0
  %1716 = vmatpush2.msra.mxu0 0.0
  %1717 = vmatprep.subr.mxu0 0.0
  %1718 = vmatpush2.msra.mxu0 0.0
  %1719 = vmatprep.subr.mxu0 0.0
  %1720 = vmatpush2.msra.mxu0 0.0
  %1721 = vmatprep.subr.mxu0 0.0
  %1722 = vmatpush2.msra.mxu0 0.0
  %1723 = vmatprep.mubr.f32.mxu0 0.0
  %v1724 = vand.u32 %v1318, 4294901760
  %1725 = vmatmul.mubr.f32.gmra.mxu0 %v1724
  %v1726 = vpop.f32.mrf.mxu0
  %v1727 = vadd.f32 %v1644, %v1726
  %v1728 = vpop.f32.mrf.mxu0
  %1729 = vdwg.mxu0
  %1730 = vmatprep.subr.mxu0 0.0
  %1731 = vmatpush1.msra.mxu0 0.0
  %1732 = vmatprep.subr.mxu0 0.0
  %1733 = vmatpush1.msra.mxu0 0.0
  %1734 = vmatprep.subr.mxu0 0.0
  %1735 = vmatpush1.msra.mxu0 0.0
  %1736 = vmatprep.subr.mxu0 0.0
  %1737 = vmatpush1.msra.mxu0 0.0
  %1738 = vmatprep.subr.mxu0 0.0
  %1739 = vmatpush1.msra.mxu0 0.0
  %1740 = vmatprep.subr.mxu0 0.0
  %1741 = vmatpush1.msra.mxu0 0.0
  %1742 = vmatprep.subr.mxu0 0.0
  %1743 = vmatpush1.msra.mxu0 0.0
  %1744 = vmatprep.subr.mxu0 0.0
  %1745 = vmatpush1.msra.mxu0 0.0
  %1746 = vmatprep.subr.mxu0 0.0
  %1747 = vmatpush1.msra.mxu0 0.0
  %1748 = vmatprep.subr.mxu0 0.0
  %1749 = vmatpush1.msra.mxu0 0.0
  %1750 = vmatprep.subr.mxu0 0.0
  %1751 = vmatpush1.msra.mxu0 0.0
  %1752 = vmatprep.subr.mxu0 0.0
  %1753 = vmatpush1.msra.mxu0 0.0
  %1754 = vmatprep.subr.mxu0 0.0
  %v1755 = vand.u32 %v1309, 4294901760
  %1756 = vmatpush1.msra.mxu0 %v1755
  %1757 = vmatprep.subr.mxu0 0.0
  %v1758 = vand.u32 %v1308, 4294901760
  %1759 = vmatpush1.msra.mxu0 %v1758
  %1760 = vmatprep.subr.mxu0 0.0
  %v1761 = vand.u32 %v1307, 4294901760
  %1762 = vmatpush1.msra.mxu0 %v1761
  %1763 = vmatprep.subr.mxu0 0.0
  %v1764 = vand.u32 %v1306, 4294901760
  %1765 = vmatpush1.msra.mxu0 %v1764
  %1766 = vmatprep.subr.mxu0 0.0
  %1767 = vmatpush2.msra.mxu0 0.0
  %1768 = vmatprep.subr.mxu0 0.0
  %1769 = vmatpush2.msra.mxu0 0.0
  %1770 = vmatprep.subr.mxu0 0.0
  %1771 = vmatpush2.msra.mxu0 0.0
  %1772 = vmatprep.subr.mxu0 0.0
  %1773 = vmatpush2.msra.mxu0 0.0
  %1774 = vmatprep.subr.mxu0 0.0
  %1775 = vmatpush2.msra.mxu0 0.0
  %1776 = vmatprep.subr.mxu0 0.0
  %1777 = vmatpush2.msra.mxu0 0.0
  %1778 = vmatprep.subr.mxu0 0.0
  %1779 = vmatpush2.msra.mxu0 0.0
  %1780 = vmatprep.subr.mxu0 0.0
  %1781 = vmatpush2.msra.mxu0 0.0
  %1782 = vmatprep.subr.mxu0 0.0
  %1783 = vmatpush2.msra.mxu0 0.0
  %1784 = vmatprep.subr.mxu0 0.0
  %1785 = vmatpush2.msra.mxu0 0.0
  %1786 = vmatprep.subr.mxu0 0.0
  %1787 = vmatpush2.msra.mxu0 0.0
  %1788 = vmatprep.subr.mxu0 0.0
  %1789 = vmatpush2.msra.mxu0 0.0
  %1790 = vmatprep.subr.mxu0 0.0
  %1791 = vmatpush2.msra.mxu0 0.0
  %1792 = vmatprep.subr.mxu0 0.0
  %1793 = vmatpush2.msra.mxu0 0.0
  %1794 = vmatprep.subr.mxu0 0.0
  %1795 = vmatpush2.msra.mxu0 0.0
  %1796 = vmatprep.subr.mxu0 0.0
  %1797 = vmatpush2.msra.mxu0 0.0
  %1798 = vmatprep.mubr.f32.mxu0 0.0
  %v1799 = vand.u32 %v1318, 4294901760
  %1800 = vmatmul.mubr.f32.gmra.mxu0 %v1799
  %v1801 = vpop.f32.mrf.mxu0
  %v1802 = vadd.f32 %v1727, %v1801
  %v1803 = vpop.f32.mrf.mxu0
  %1804 = vdwg.mxu0
  %v1805 = vmax.f32 %v1802, 0.0
  %v1806 = vfloor.f32 %v1805
  %vm1807 = vcmask 58368
  %1808 = vst.msk [vmem:[%s7] sm:$0x3] %vm1807, %v1806
  // Predicated region
  $region30: #{controller_forward.1} parent=0 // pred_check
    _
  $region31: #{controller_forward.1} parent=0 // pred_check_branch
    %1810 = sbr.rel (0) target = $region33
  $region32: #{controller_forward.1} parent=0 // pred_region
    _
  $region33: #{controller_forward.1} parent=0 // pred_fallthru
    _
  // Predicated region
  $region34: #{controller_forward.1} parent=0 // pred_check
    _
  $region35: #{controller_forward.1} parent=0 // pred_check_branch
    %1812 = sbr.rel (0) target = $region37
  $region36: #{controller_forward.1} parent=0 // pred_region
    _
  $region37: #{controller_forward.1} parent=0 // pred_fallthru
    _

</llo_original>
